<compile_context>
chip_gen: v7x
topology: tpu7x:2x2x1
jax: 0.10.0
libtpu: 0.0.40
codegen_flags: <defaults>
</compile_context>

<pallas_src>
import functools

import jax
import jax.numpy as jnp
from jax import lax
from jax.experimental import pallas as pl
from jax.experimental.pallas import tpu as pltpu

LN_EPS = 1e-5  # nn.LayerNorm default


def transformer_layer_kernel(x_ref, w_in_ref, b_in_ref, w_out_ref, b_out_ref,
                             ln1_w_ref, ln1_b_ref,
                             w1_ref, b1_ref, w2_ref, b2_ref,
                             ln2_w_ref, ln2_b_ref,
                             o_ref, *, num_heads):
    """One batch element per grid step: MHA + residual/LN + FFN + residual/LN."""
    x = x_ref[0]                                   # (S, E) float32
    S, E = x.shape
    H = num_heads
    Dh = E // H
    scale = 1.0 / (Dh ** 0.5)

    x_bf = x.astype(jnp.bfloat16)

    # --- self-attention: packed in-projection. Weights arrive pre-transposed (E, 3E). ---
    qkv = jnp.dot(x_bf, w_in_ref[...],
                  preferred_element_type=jnp.float32) + b_in_ref[...]        # (S, 3E) f32
    q = qkv[:, :E] * scale
    k = qkv[:, E:2 * E]
    v = qkv[:, 2 * E:]

    # (S, E) -> (H, S, Dh), batched over heads (single MXU contraction per step).
    qh = q.reshape(S, H, Dh).swapaxes(0, 1).astype(jnp.bfloat16)
    kh = k.reshape(S, H, Dh).swapaxes(0, 1).astype(jnp.bfloat16)
    vh = v.reshape(S, H, Dh).swapaxes(0, 1).astype(jnp.bfloat16)

    scores = jnp.einsum('hqd,hkd->hqk', qh, kh,
                        preferred_element_type=jnp.float32)                  # (H, S, S) f32
    scores = scores - jnp.max(scores, axis=-1, keepdims=True)
    p = jnp.exp(scores)
    p = p * pl.reciprocal(jnp.sum(p, axis=-1, keepdims=True), approx=True)

    ctx = jnp.einsum('hqk,hkd->hqd', p.astype(jnp.bfloat16), vh,
                     preferred_element_type=jnp.float32)                     # (H, S, Dh) f32
    attn = ctx.swapaxes(0, 1).reshape(S, E)

    attn = jnp.dot(attn.astype(jnp.bfloat16), w_out_ref[...],
                   preferred_element_type=jnp.float32) + b_out_ref[...]      # (S, E) f32

    # --- residual + LayerNorm 1 (dropout = identity), f32 math ---
    h1 = x + attn
    mu1 = jnp.mean(h1, axis=-1, keepdims=True)
    var1 = jnp.mean((h1 - mu1) ** 2, axis=-1, keepdims=True)
    h1n = (h1 - mu1) * lax.rsqrt(var1 + LN_EPS) * ln1_w_ref[...] + ln1_b_ref[...]

    # --- feed-forward: Linear -> ReLU -> (Dropout=identity) -> Linear ---
    ff = jnp.dot(h1n.astype(jnp.bfloat16), w1_ref[...],
                 preferred_element_type=jnp.float32) + b1_ref[...]           # (S, F) f32
    ff = jnp.maximum(ff, 0.0)
    ff = jnp.dot(ff.astype(jnp.bfloat16), w2_ref[...],
                 preferred_element_type=jnp.float32) + b2_ref[...]           # (S, E) f32

    # --- residual + LayerNorm 2 ---
    h2 = h1n + ff
    mu2 = jnp.mean(h2, axis=-1, keepdims=True)
    var2 = jnp.mean((h2 - mu2) ** 2, axis=-1, keepdims=True)
    o_ref[0] = (h2 - mu2) * lax.rsqrt(var2 + LN_EPS) * ln2_w_ref[...] + ln2_b_ref[...]


def transformer_layer(x, params, num_heads):
    B, S, E = x.shape
    F_dim = params["w1"].shape[0]

    # Pre-transpose PyTorch (out, in) weights to (in, out) once, outside the kernel,
    # and cast them to bf16 (MXU inputs; accumulation stays f32 inside the kernel).
    w_in_t = params["w_in"].T.astype(jnp.bfloat16)    # (E, 3E)
    w_out_t = params["w_out"].T.astype(jnp.bfloat16)  # (E, E)
    w1_t = params["w1"].T.astype(jnp.bfloat16)        # (E, F)
    w2_t = params["w2"].T.astype(jnp.bfloat16)        # (F, E)

    def full(shape):
        zeros = (0,) * len(shape)
        return pl.BlockSpec(shape, lambda b: zeros)

    in_specs = [
        pl.BlockSpec((1, S, E), lambda b: (b, 0, 0)),   # x
        full((E, 3 * E)), full((1, 3 * E)),             # in_proj weight / bias
        full((E, E)), full((1, E)),                     # out_proj weight / bias
        full((1, E)), full((1, E)),                     # norm1 weight / bias
        full((E, F_dim)), full((1, F_dim)),             # ff linear1 weight / bias
        full((F_dim, E)), full((1, E)),                 # ff linear2 weight / bias
        full((1, E)), full((1, E)),                     # norm2 weight / bias
    ]

    # Advisory cost estimate (per layer): projections + attention + FFN.
    flops_per_b = 2 * S * (3 * E * E + 2 * S * E + E * E + 2 * E * F_dim)
    cost = pl.CostEstimate(
        flops=B * flops_per_b,
        transcendentals=B * (num_heads * S * S + 4 * S),
        bytes_accessed=int(2 * B * S * E * 4 + 2 * (4 * E * E + 2 * E * F_dim)),
    )

    # VMEM budget: bf16 weights + f32 biases/IO (double-buffered) + in-kernel activations.
    weight_bytes = 2 * (3 * E * E + E * E + 2 * E * F_dim)
    io_bytes = 2 * S * E * 4
    act_bytes = 4 * (S * 3 * E + 3 * num_heads * S * S + S * F_dim + 6 * S * E)
    vmem_limit = min(2 * (2 * (weight_bytes + io_bytes) + act_bytes) + (8 << 20), 64 << 20)

    kernel = functools.partial(transformer_layer_kernel, num_heads=num_heads)
    return pl.pallas_call(
        kernel,
        out_shape=jax.ShapeDtypeStruct((B, S, E), jnp.float32),
        grid=(B,),
        in_specs=in_specs,
        out_specs=pl.BlockSpec((1, S, E), lambda b: (b, 0, 0)),
        compiler_params=pltpu.CompilerParams(
            dimension_semantics=("parallel",),
            vmem_limit_bytes=int(vmem_limit),
        ),
        cost_estimate=cost,
    )(x,
      w_in_t, params["b_in"], w_out_t, params["b_out"],
      params["ln1_w"], params["ln1_b"],
      w1_t, params["b1"], w2_t, params["b2"],
      params["ln2_w"], params["ln2_b"])


def init_params(key, embed_dim, num_heads, ff_hidden_dim):
    ks = jax.random.split(key, 6)
    s = 0.02
    return {
        # nn.MultiheadAttention packed in-projection (3E, E) and out_proj (E, E)
        "w_in":  s * jax.random.normal(ks[0], (3 * embed_dim, embed_dim), jnp.float32),
        "b_in":  s * jax.random.normal(ks[1], (1, 3 * embed_dim), jnp.float32),
        "w_out": s * jax.random.normal(ks[2], (embed_dim, embed_dim), jnp.float32),
        "b_out": s * jax.random.normal(ks[3], (1, embed_dim), jnp.float32),
        # LayerNorms: default ones / zeros
        "ln1_w": jnp.ones((1, embed_dim), jnp.float32),
        "ln1_b": jnp.zeros((1, embed_dim), jnp.float32),
        "ln2_w": jnp.ones((1, embed_dim), jnp.float32),
        "ln2_b": jnp.zeros((1, embed_dim), jnp.float32),
        # Feed-forward: Linear(E->F), Linear(F->E)  (PyTorch stores (out, in))
        "w1": s * jax.random.normal(ks[4], (ff_hidden_dim, embed_dim), jnp.float32),
        "b1": jnp.zeros((1, ff_hidden_dim), jnp.float32),
        "w2": s * jax.random.normal(ks[5], (embed_dim, ff_hidden_dim), jnp.float32),
        "b2": jnp.zeros((1, embed_dim), jnp.float32),
    }


if __name__ == "__main__":
    B, S, E, H, FF = 2, 8, 32, 4, 64
    key = jax.random.PRNGKey(0)
    kx, kp = jax.random.split(key)
    x = jax.random.normal(kx, (B, S, E), jnp.float32)
    params = init_params(kp, E, H, FF)

    out = transformer_layer(x, params, num_heads=H)
    out = jax.block_until_ready(out)
    assert out.shape == (B, S, E)
    assert bool(jnp.all(jnp.isfinite(out)))
    print("KERNEL_OK")
</pallas_src>

<mosaic_0001>
module attributes {stable_mosaic.version = 11 : i64} {
  func.func @transformer_layer_kernel(%arg0: i32, %arg1: memref<1x8x32xf32, #tpu.memory_space<vmem>>, %arg2: memref<32x96xbf16, #tpu.memory_space<vmem>>, %arg3: memref<1x96xf32, #tpu.memory_space<vmem>>, %arg4: memref<32x32xbf16, #tpu.memory_space<vmem>>, %arg5: memref<1x32xf32, #tpu.memory_space<vmem>>, %arg6: memref<1x32xf32, #tpu.memory_space<vmem>>, %arg7: memref<1x32xf32, #tpu.memory_space<vmem>>, %arg8: memref<32x64xbf16, #tpu.memory_space<vmem>>, %arg9: memref<1x64xf32, #tpu.memory_space<vmem>>, %arg10: memref<64x32xbf16, #tpu.memory_space<vmem>>, %arg11: memref<1x32xf32, #tpu.memory_space<vmem>>, %arg12: memref<1x32xf32, #tpu.memory_space<vmem>>, %arg13: memref<1x32xf32, #tpu.memory_space<vmem>>, %arg14: memref<1x8x32xf32, #tpu.memory_space<vmem>>) attributes {dimension_semantics = [#tpu.dimension_semantics<parallel>], iteration_bounds = array<i64: 2>, scalar_prefetch = 0 : i64, scratch_operands = 0 : i64, tpu.core_type = #tpu.core_type<tc>, window_params = [{transform_indices = @transform_0, window_bounds = array<i64: 1, 8, 32>}, {pipeline_mode = #tpu.pipeline_mode<synchronous>, transform_indices = @transform_1, window_bounds = array<i64: 32, 96>}, {pipeline_mode = #tpu.pipeline_mode<synchronous>, transform_indices = @transform_2, window_bounds = array<i64: 1, 96>}, {pipeline_mode = #tpu.pipeline_mode<synchronous>, transform_indices = @transform_3, window_bounds = array<i64: 32, 32>}, {pipeline_mode = #tpu.pipeline_mode<synchronous>, transform_indices = @transform_4, window_bounds = array<i64: 1, 32>}, {pipeline_mode = #tpu.pipeline_mode<synchronous>, transform_indices = @transform_5, window_bounds = array<i64: 1, 32>}, {pipeline_mode = #tpu.pipeline_mode<synchronous>, transform_indices = @transform_6, window_bounds = array<i64: 1, 32>}, {pipeline_mode = #tpu.pipeline_mode<synchronous>, transform_indices = @transform_7, window_bounds = array<i64: 32, 64>}, {pipeline_mode = #tpu.pipeline_mode<synchronous>, transform_indices = @transform_8, window_bounds = array<i64: 1, 64>}, {pipeline_mode = #tpu.pipeline_mode<synchronous>, transform_indices = @transform_9, window_bounds = array<i64: 64, 32>}, {pipeline_mode = #tpu.pipeline_mode<synchronous>, transform_indices = @transform_10, window_bounds = array<i64: 1, 32>}, {pipeline_mode = #tpu.pipeline_mode<synchronous>, transform_indices = @transform_11, window_bounds = array<i64: 1, 32>}, {pipeline_mode = #tpu.pipeline_mode<synchronous>, transform_indices = @transform_12, window_bounds = array<i64: 1, 32>}, {transform_indices = @transform_13, window_bounds = array<i64: 1, 8, 32>}]} {
    %c0 = arith.constant 0 : index
    %c0_0 = arith.constant 0 : index
    %c0_1 = arith.constant 0 : index
    %0 = vector.load %arg1[%c0, %c0_0, %c0_1] : memref<1x8x32xf32, #tpu.memory_space<vmem>>, vector<1x8x32xf32>
    %1 = vector.shape_cast %0 : vector<1x8x32xf32> to vector<8x32xf32>
    %2 = arith.truncf %1 : vector<8x32xf32> to vector<8x32xbf16>
    %c0_2 = arith.constant 0 : index
    %c0_3 = arith.constant 0 : index
    %3 = vector.load %arg2[%c0_2, %c0_3] : memref<32x96xbf16, #tpu.memory_space<vmem>>, vector<32x96xbf16>
    %cst = arith.constant dense<0.000000e+00> : vector<8x96xf32>
    %4 = tpu.matmul %2, %3, %cst {dimension_numbers = #tpu.dot_dimension_numbers<[1], [0], [0], [1], [0, 0, 1, 1], [], []>} : vector<8x32xbf16>, vector<32x96xbf16>, vector<8x96xf32> -> vector<8x96xf32>
    %c0_4 = arith.constant 0 : index
    %c0_5 = arith.constant 0 : index
    %5 = vector.load %arg3[%c0_4, %c0_5] : memref<1x96xf32, #tpu.memory_space<vmem>>, vector<1x96xf32>
    %6 = vector.broadcast %5 : vector<1x96xf32> to vector<8x96xf32>
    %7 = arith.addf %4, %6 : vector<8x96xf32>
    %8 = vector.extract_strided_slice %7 {offsets = [0, 0], sizes = [8, 32], strides = [1, 1]} : vector<8x96xf32> to vector<8x32xf32>
    %cst_6 = arith.constant 0.353553385 : f32
    %9 = vector.broadcast %cst_6 : f32 to vector<8x32xf32>
    %10 = arith.mulf %8, %9 : vector<8x32xf32>
    %11 = vector.extract_strided_slice %7 {offsets = [0, 32], sizes = [8, 32], strides = [1, 1]} : vector<8x96xf32> to vector<8x32xf32>
    %12 = vector.extract_strided_slice %7 {offsets = [0, 64], sizes = [8, 32], strides = [1, 1]} : vector<8x96xf32> to vector<8x32xf32>
    %13 = vector.shape_cast %10 : vector<8x32xf32> to vector<8x4x8xf32>
    %14 = tpu.transpose %13, [1, 0, 2] : vector<8x4x8xf32> -> vector<4x8x8xf32>
    %15 = arith.truncf %14 : vector<4x8x8xf32> to vector<4x8x8xbf16>
    %16 = vector.shape_cast %11 : vector<8x32xf32> to vector<8x4x8xf32>
    %17 = tpu.transpose %16, [1, 0, 2] : vector<8x4x8xf32> -> vector<4x8x8xf32>
    %18 = arith.truncf %17 : vector<4x8x8xf32> to vector<4x8x8xbf16>
    %19 = vector.shape_cast %12 : vector<8x32xf32> to vector<8x4x8xf32>
    %20 = tpu.transpose %19, [1, 0, 2] : vector<8x4x8xf32> -> vector<4x8x8xf32>
    %21 = arith.truncf %20 : vector<4x8x8xf32> to vector<4x8x8xbf16>
    "tpu.trace_start"() <{level = 10 : i32, message = "hqd,hkd->hqk"}> : () -> ()
    %cst_7 = arith.constant dense<0.000000e+00> : vector<4x8x8xf32>
    %22 = tpu.matmul %15, %18, %cst_7 {dimension_numbers = #tpu.dot_dimension_numbers<[2], [2], [1], [1], [0, 0, 0, 1, 1, 1], [0], [0]>} : vector<4x8x8xbf16>, vector<4x8x8xbf16>, vector<4x8x8xf32> -> vector<4x8x8xf32>
    "tpu.trace_stop"() : () -> ()
    %cst_8 = arith.constant dense<0xFF800000> : vector<4x8xf32>
    %23 = vector.multi_reduction <maximumf>, %22, %cst_8 [2] : vector<4x8x8xf32> to vector<4x8xf32>
    %24 = vector.shape_cast %23 : vector<4x8xf32> to vector<4x8x1xf32>
    %25 = vector.broadcast %24 : vector<4x8x1xf32> to vector<4x8x8xf32>
    %26 = arith.subf %22, %25 : vector<4x8x8xf32>
    %27 = math.exp %26 : vector<4x8x8xf32>
    %cst_9 = arith.constant dense<0.000000e+00> : vector<4x8xf32>
    %28 = vector.multi_reduction <add>, %27, %cst_9 [2] : vector<4x8x8xf32> to vector<4x8xf32>
    %29 = vector.shape_cast %28 : vector<4x8xf32> to vector<4x8x1xf32>
    %30 = tpu.reciprocal %29 {approx = true} : vector<4x8x1xf32> -> vector<4x8x1xf32>
    %31 = vector.broadcast %30 : vector<4x8x1xf32> to vector<4x8x8xf32>
    %32 = arith.mulf %27, %31 : vector<4x8x8xf32>
    %33 = arith.truncf %32 : vector<4x8x8xf32> to vector<4x8x8xbf16>
    "tpu.trace_start"() <{level = 10 : i32, message = "hqk,hkd->hqd"}> : () -> ()
    %cst_10 = arith.constant dense<0.000000e+00> : vector<4x8x8xf32>
    %34 = tpu.matmul %33, %21, %cst_10 {dimension_numbers = #tpu.dot_dimension_numbers<[2], [1], [1], [2], [0, 0, 0, 1, 1, 2], [0], [0]>} : vector<4x8x8xbf16>, vector<4x8x8xbf16>, vector<4x8x8xf32> -> vector<4x8x8xf32>
    "tpu.trace_stop"() : () -> ()
    %35 = tpu.transpose %34, [1, 0, 2] : vector<4x8x8xf32> -> vector<8x4x8xf32>
    %36 = vector.shape_cast %35 : vector<8x4x8xf32> to vector<8x32xf32>
    %37 = arith.truncf %36 : vector<8x32xf32> to vector<8x32xbf16>
    %c0_11 = arith.constant 0 : index
    %c0_12 = arith.constant 0 : index
    %38 = vector.load %arg4[%c0_11, %c0_12] : memref<32x32xbf16, #tpu.memory_space<vmem>>, vector<32x32xbf16>
    %cst_13 = arith.constant dense<0.000000e+00> : vector<8x32xf32>
    %39 = tpu.matmul %37, %38, %cst_13 {dimension_numbers = #tpu.dot_dimension_numbers<[1], [0], [0], [1], [0, 0, 1, 1], [], []>} : vector<8x32xbf16>, vector<32x32xbf16>, vector<8x32xf32> -> vector<8x32xf32>
    %c0_14 = arith.constant 0 : index
    %c0_15 = arith.constant 0 : index
    %40 = vector.load %arg5[%c0_14, %c0_15] : memref<1x32xf32, #tpu.memory_space<vmem>>, vector<1x32xf32>
    %41 = vector.broadcast %40 : vector<1x32xf32> to vector<8x32xf32>
    %42 = arith.addf %39, %41 : vector<8x32xf32>
    %43 = arith.addf %1, %42 : vector<8x32xf32>
    %cst_16 = arith.constant dense<0.000000e+00> : vector<8xf32>
    %44 = vector.multi_reduction <add>, %43, %cst_16 [1] : vector<8x32xf32> to vector<8xf32>
    %45 = vector.shape_cast %44 : vector<8xf32> to vector<8x1xf32>
    %cst_17 = arith.constant 3.200000e+01 : f32
    %46 = vector.broadcast %cst_17 : f32 to vector<8x1xf32>
    %47 = arith.divf %45, %46 : vector<8x1xf32>
    %48 = vector.broadcast %47 : vector<8x1xf32> to vector<8x32xf32>
    %49 = arith.subf %43, %48 : vector<8x32xf32>
    %50 = arith.mulf %49, %49 : vector<8x32xf32>
    %cst_18 = arith.constant dense<0.000000e+00> : vector<8xf32>
    %51 = vector.multi_reduction <add>, %50, %cst_18 [1] : vector<8x32xf32> to vector<8xf32>
    %52 = vector.shape_cast %51 : vector<8xf32> to vector<8x1xf32>
    %cst_19 = arith.constant 3.200000e+01 : f32
    %53 = vector.broadcast %cst_19 : f32 to vector<8x1xf32>
    %54 = arith.divf %52, %53 : vector<8x1xf32>
    %55 = vector.broadcast %47 : vector<8x1xf32> to vector<8x32xf32>
    %56 = arith.subf %43, %55 : vector<8x32xf32>
    %cst_20 = arith.constant 9.99999974E-6 : f32
    %57 = vector.broadcast %cst_20 : f32 to vector<8x1xf32>
    %58 = arith.addf %54, %57 : vector<8x1xf32>
    %59 = math.rsqrt %58 : vector<8x1xf32>
    %60 = vector.broadcast %59 : vector<8x1xf32> to vector<8x32xf32>
    %61 = arith.mulf %56, %60 : vector<8x32xf32>
    %c0_21 = arith.constant 0 : index
    %c0_22 = arith.constant 0 : index
    %62 = vector.load %arg6[%c0_21, %c0_22] : memref<1x32xf32, #tpu.memory_space<vmem>>, vector<1x32xf32>
    %63 = vector.broadcast %62 : vector<1x32xf32> to vector<8x32xf32>
    %64 = arith.mulf %61, %63 : vector<8x32xf32>
    %c0_23 = arith.constant 0 : index
    %c0_24 = arith.constant 0 : index
    %65 = vector.load %arg7[%c0_23, %c0_24] : memref<1x32xf32, #tpu.memory_space<vmem>>, vector<1x32xf32>
    %66 = vector.broadcast %65 : vector<1x32xf32> to vector<8x32xf32>
    %67 = arith.addf %64, %66 : vector<8x32xf32>
    %68 = arith.truncf %67 : vector<8x32xf32> to vector<8x32xbf16>
    %c0_25 = arith.constant 0 : index
    %c0_26 = arith.constant 0 : index
    %69 = vector.load %arg8[%c0_25, %c0_26] : memref<32x64xbf16, #tpu.memory_space<vmem>>, vector<32x64xbf16>
    %cst_27 = arith.constant dense<0.000000e+00> : vector<8x64xf32>
    %70 = tpu.matmul %68, %69, %cst_27 {dimension_numbers = #tpu.dot_dimension_numbers<[1], [0], [0], [1], [0, 0, 1, 1], [], []>} : vector<8x32xbf16>, vector<32x64xbf16>, vector<8x64xf32> -> vector<8x64xf32>
    %c0_28 = arith.constant 0 : index
    %c0_29 = arith.constant 0 : index
    %71 = vector.load %arg9[%c0_28, %c0_29] : memref<1x64xf32, #tpu.memory_space<vmem>>, vector<1x64xf32>
    %72 = vector.broadcast %71 : vector<1x64xf32> to vector<8x64xf32>
    %73 = arith.addf %70, %72 : vector<8x64xf32>
    %cst_30 = arith.constant 0.000000e+00 : f32
    %74 = vector.broadcast %cst_30 : f32 to vector<8x64xf32>
    %75 = arith.maximumf %73, %74 : vector<8x64xf32>
    %76 = arith.truncf %75 : vector<8x64xf32> to vector<8x64xbf16>
    %c0_31 = arith.constant 0 : index
    %c0_32 = arith.constant 0 : index
    %77 = vector.load %arg10[%c0_31, %c0_32] : memref<64x32xbf16, #tpu.memory_space<vmem>>, vector<64x32xbf16>
    %cst_33 = arith.constant dense<0.000000e+00> : vector<8x32xf32>
    %78 = tpu.matmul %76, %77, %cst_33 {dimension_numbers = #tpu.dot_dimension_numbers<[1], [0], [0], [1], [0, 0, 1, 1], [], []>} : vector<8x64xbf16>, vector<64x32xbf16>, vector<8x32xf32> -> vector<8x32xf32>
    %c0_34 = arith.constant 0 : index
    %c0_35 = arith.constant 0 : index
    %79 = vector.load %arg11[%c0_34, %c0_35] : memref<1x32xf32, #tpu.memory_space<vmem>>, vector<1x32xf32>
    %80 = vector.broadcast %79 : vector<1x32xf32> to vector<8x32xf32>
    %81 = arith.addf %78, %80 : vector<8x32xf32>
    %82 = arith.addf %67, %81 : vector<8x32xf32>
    %cst_36 = arith.constant dense<0.000000e+00> : vector<8xf32>
    %83 = vector.multi_reduction <add>, %82, %cst_36 [1] : vector<8x32xf32> to vector<8xf32>
    %84 = vector.shape_cast %83 : vector<8xf32> to vector<8x1xf32>
    %cst_37 = arith.constant 3.200000e+01 : f32
    %85 = vector.broadcast %cst_37 : f32 to vector<8x1xf32>
    %86 = arith.divf %84, %85 : vector<8x1xf32>
    %87 = vector.broadcast %86 : vector<8x1xf32> to vector<8x32xf32>
    %88 = arith.subf %82, %87 : vector<8x32xf32>
    %89 = arith.mulf %88, %88 : vector<8x32xf32>
    %cst_38 = arith.constant dense<0.000000e+00> : vector<8xf32>
    %90 = vector.multi_reduction <add>, %89, %cst_38 [1] : vector<8x32xf32> to vector<8xf32>
    %91 = vector.shape_cast %90 : vector<8xf32> to vector<8x1xf32>
    %cst_39 = arith.constant 3.200000e+01 : f32
    %92 = vector.broadcast %cst_39 : f32 to vector<8x1xf32>
    %93 = arith.divf %91, %92 : vector<8x1xf32>
    %94 = vector.broadcast %86 : vector<8x1xf32> to vector<8x32xf32>
    %95 = arith.subf %82, %94 : vector<8x32xf32>
    %cst_40 = arith.constant 9.99999974E-6 : f32
    %96 = vector.broadcast %cst_40 : f32 to vector<8x1xf32>
    %97 = arith.addf %93, %96 : vector<8x1xf32>
    %98 = math.rsqrt %97 : vector<8x1xf32>
    %99 = vector.broadcast %98 : vector<8x1xf32> to vector<8x32xf32>
    %100 = arith.mulf %95, %99 : vector<8x32xf32>
    %c0_41 = arith.constant 0 : index
    %c0_42 = arith.constant 0 : index
    %101 = vector.load %arg12[%c0_41, %c0_42] : memref<1x32xf32, #tpu.memory_space<vmem>>, vector<1x32xf32>
    %102 = vector.broadcast %101 : vector<1x32xf32> to vector<8x32xf32>
    %103 = arith.mulf %100, %102 : vector<8x32xf32>
    %c0_43 = arith.constant 0 : index
    %c0_44 = arith.constant 0 : index
    %104 = vector.load %arg13[%c0_43, %c0_44] : memref<1x32xf32, #tpu.memory_space<vmem>>, vector<1x32xf32>
    %105 = vector.broadcast %104 : vector<1x32xf32> to vector<8x32xf32>
    %106 = arith.addf %103, %105 : vector<8x32xf32>
    %c0_45 = arith.constant 0 : index
    %c0_46 = arith.constant 0 : index
    %c0_47 = arith.constant 0 : index
    %107 = vector.load %arg14[%c0_45, %c0_46, %c0_47] : memref<1x8x32xf32, #tpu.memory_space<vmem>>, vector<1x8x32xf32>
    %108 = vector.shape_cast %107 : vector<1x8x32xf32> to vector<8x32xf32>
    %109 = vector.shape_cast %106 : vector<8x32xf32> to vector<1x8x32xf32>
    tpu.vector_store %arg14[%c0_45, %c0_46, %c0_47], %109 {strides = array<i32>} : memref<1x8x32xf32, #tpu.memory_space<vmem>>, vector<1x8x32xf32>,
    return
  }
  func.func @transform_0(%arg0: i32) -> (i32, i32, i32) {
    %c0_i32 = arith.constant 0 : i32
    %c0_i32_0 = arith.constant 0 : i32
    %c0_i32_1 = arith.constant 0 : i32
    return %arg0, %c0_i32, %c0_i32_0 : i32, i32, i32
  }
  func.func @transform_1(%arg0: i32) -> (i32, i32) {
    %c0_i32 = arith.constant 0 : i32
    %c0_i32_0 = arith.constant 0 : i32
    %c0_i32_1 = arith.constant 0 : i32
    return %c0_i32, %c0_i32_0 : i32, i32
  }
  func.func @transform_2(%arg0: i32) -> (i32, i32) {
    %c0_i32 = arith.constant 0 : i32
    %c0_i32_0 = arith.constant 0 : i32
    %c0_i32_1 = arith.constant 0 : i32
    return %c0_i32, %c0_i32_0 : i32, i32
  }
  func.func @transform_3(%arg0: i32) -> (i32, i32) {
    %c0_i32 = arith.constant 0 : i32
    %c0_i32_0 = arith.constant 0 : i32
    %c0_i32_1 = arith.constant 0 : i32
    return %c0_i32, %c0_i32_0 : i32, i32
  }
  func.func @transform_4(%arg0: i32) -> (i32, i32) {
    %c0_i32 = arith.constant 0 : i32
    %c0_i32_0 = arith.constant 0 : i32
    %c0_i32_1 = arith.constant 0 : i32
    return %c0_i32, %c0_i32_0 : i32, i32
  }
  func.func @transform_5(%arg0: i32) -> (i32, i32) {
    %c0_i32 = arith.constant 0 : i32
    %c0_i32_0 = arith.constant 0 : i32
    %c0_i32_1 = arith.constant 0 : i32
    return %c0_i32, %c0_i32_0 : i32, i32
  }
  func.func @transform_6(%arg0: i32) -> (i32, i32) {
    %c0_i32 = arith.constant 0 : i32
    %c0_i32_0 = arith.constant 0 : i32
    %c0_i32_1 = arith.constant 0 : i32
    return %c0_i32, %c0_i32_0 : i32, i32
  }
  func.func @transform_7(%arg0: i32) -> (i32, i32) {
    %c0_i32 = arith.constant 0 : i32
    %c0_i32_0 = arith.constant 0 : i32
    %c0_i32_1 = arith.constant 0 : i32
    return %c0_i32, %c0_i32_0 : i32, i32
  }
  func.func @transform_8(%arg0: i32) -> (i32, i32) {
    %c0_i32 = arith.constant 0 : i32
    %c0_i32_0 = arith.constant 0 : i32
    %c0_i32_1 = arith.constant 0 : i32
    return %c0_i32, %c0_i32_0 : i32, i32
  }
  func.func @transform_9(%arg0: i32) -> (i32, i32) {
    %c0_i32 = arith.constant 0 : i32
    %c0_i32_0 = arith.constant 0 : i32
    %c0_i32_1 = arith.constant 0 : i32
    return %c0_i32, %c0_i32_0 : i32, i32
  }
  func.func @transform_10(%arg0: i32) -> (i32, i32) {
    %c0_i32 = arith.constant 0 : i32
    %c0_i32_0 = arith.constant 0 : i32
    %c0_i32_1 = arith.constant 0 : i32
    return %c0_i32, %c0_i32_0 : i32, i32
  }
  func.func @transform_11(%arg0: i32) -> (i32, i32) {
    %c0_i32 = arith.constant 0 : i32
    %c0_i32_0 = arith.constant 0 : i32
    %c0_i32_1 = arith.constant 0 : i32
    return %c0_i32, %c0_i32_0 : i32, i32
  }
  func.func @transform_12(%arg0: i32) -> (i32, i32) {
    %c0_i32 = arith.constant 0 : i32
    %c0_i32_0 = arith.constant 0 : i32
    %c0_i32_1 = arith.constant 0 : i32
    return %c0_i32, %c0_i32_0 : i32, i32
  }
  func.func @transform_13(%arg0: i32) -> (i32, i32, i32) {
    %c0_i32 = arith.constant 0 : i32
    %c0_i32_0 = arith.constant 0 : i32
    %c0_i32_1 = arith.constant 0 : i32
    return %arg0, %c0_i32, %c0_i32_0 : i32, i32, i32
  }
}

</mosaic_0001>

<llo_original>
// kernel: tpu_custom_call.1
$region0: #{tpu_custom_call.1}
  #allocation0 [shape = 'u32[]', space=smem, size = 0x4, offset = 0x4, fixed_abs, tag = 'smem constant byte address 0x4 - core index']
  #allocation1 [shape = 'u32[144,128]{1,0:T(1,128)}', space=vmem, size = 0x12000, scoped, tag = 'internal scratch']
  %s0 = inlined_call_operand.vmem [shape: f32[2,8,32], index: 0, kind: input, shape index: {}]
  %s1 = inlined_call_operand.vmem [shape: bf16[32,96], index: 1, kind: input, shape index: {}]
  %s2 = inlined_call_operand.vmem [shape: f32[1,96], index: 2, kind: input, shape index: {}]
  %s3 = inlined_call_operand.vmem [shape: bf16[32,32], index: 3, kind: input, shape index: {}]
  %s4 = inlined_call_operand.vmem [shape: f32[1,32], index: 4, kind: input, shape index: {}]
  %s5 = inlined_call_operand.vmem [shape: f32[1,32], index: 5, kind: input, shape index: {}]
  %s6 = inlined_call_operand.vmem [shape: f32[1,32], index: 6, kind: input, shape index: {}]
  %s7 = inlined_call_operand.hbm [shape: bf16[32,64], index: 7, kind: input, shape index: {}]
  %s8 = inlined_call_operand.vmem [shape: f32[1,64], index: 8, kind: input, shape index: {}]
  %s9 = inlined_call_operand.vmem [shape: bf16[64,32], index: 9, kind: input, shape index: {}]
  %s10 = inlined_call_operand.vmem [shape: f32[1,32], index: 10, kind: input, shape index: {}]
  %s11 = inlined_call_operand.vmem [shape: f32[1,32], index: 11, kind: input, shape index: {}]
  %s12 = inlined_call_operand.vmem [shape: f32[1,32], index: 12, kind: input, shape index: {}]
  %s13 = inlined_call_operand.hbm [shape: f32[2,8,32], index: 13, kind: output, shape index: {}]
  %s14 = sld [smem:[#allocation0]]
  $region89: #{tpu_custom_call.1} parent=0
    _
  %s16 = ssub.s32 1, %s14
  %s17 = scalar_select 0, %s16, %s14
  $region1: #{tpu_custom_call.1} parent=0
    #allocation2 [shape = 'u8[8192]{0}', space=vmem, size = 0x2000, scoped, tag = 'input window, operand 7, single buffered']
    #allocation3 [shape = 's32[2]{0}', space=sflag, size = 0x8, scoped, tag = 'scoped memory for tpu_custom_call.1']
    #allocation4 [shape = 's32[2]{0}', space=sflag, size = 0x8, scoped, tag = 'scoped memory for tpu_custom_call.1']
    #allocation5 [shape = 'u8[8192]{0}', space=vmem, size = 0x2000, scoped, tag = 'output window, operand 0']
    %18 = vsyncpa [#allocation3], 0
    %19 = vsyncpa [#allocation4], 0
    %s20 = scalar_lea.sflag [#allocation4], 1
    %21 = vsyncpa %s20, 0
    loop: start=0, step=1, limit=4
    $region2: #{tpu_custom_call.1} parent=1 // loop_pre_header
      _
    $region3: #{tpu_custom_call.1} parent=1 // loop_header
      %s23 = sphi 0, %s27
      %p24 = scmp.ge.s32.totalorder %s23, 4
      %s33 = sphi 0, %s35
      %s36 = sphi 0, %s33
      %s37 = sphi 0, %s36
      %s53 = sphi 0, %s37
      %s57 = sphi 0, %s57
      %s59 = sphi 0, %s57
      %s60 = sphi 0, %s59
      %s74 = sphi 0, %s60
      %s78 = sphi 0, %s78
      %s80 = sphi 0, %s78
      %s81 = sphi 0, %s80
      %s95 = sphi 0, %s81
      %s99 = sphi 0, %s99
      %s101 = sphi 0, %s99
      %s102 = sphi 0, %s101
      %s116 = sphi 0, %s102
      %s120 = sphi 0, %s120
      %s122 = sphi 0, %s120
      %s123 = sphi 0, %s122
      %s137 = sphi 0, %s123
      %s141 = sphi 0, %s141
      %s143 = sphi 0, %s141
      %s144 = sphi 0, %s143
      %s158 = sphi 0, %s144
      %s162 = sphi 0, %s162
      %s164 = sphi 0, %s162
      %s165 = sphi 0, %s164
      %s179 = sphi 0, %s165
      %s183 = sphi 0, %s183
      %s185 = sphi 0, %s183
      %s186 = sphi 0, %s185
      %s200 = sphi 0, %s186
      %s204 = sphi 0, %s204
      %s206 = sphi 0, %s204
      %s207 = sphi 0, %s206
      %s221 = sphi 0, %s207
      %s225 = sphi 0, %s225
      %s227 = sphi 0, %s225
      %s228 = sphi 0, %s227
      %s242 = sphi 0, %s228
      %s246 = sphi 0, %s246
      %s248 = sphi 0, %s246
      %s249 = sphi 0, %s248
      %s263 = sphi 0, %s249
      %s267 = sphi 0, %s267
      %s269 = sphi 0, %s267
      %s270 = sphi 0, %s269
      %s284 = sphi 0, %s270
      %s288 = sphi 0, %s288
      %s290 = sphi 0, %s288
      %s291 = sphi 0, %s290
      %s305 = sphi 0, %s291
      %s311 = sphi 0, %s313
      %s314 = sphi 0, %s311
      %s315 = sphi 0, %s314
      %s331 = sphi 0, %s315
    $region4: #{tpu_custom_call.1} parent=1 // loop_header_branch
      %26 = sbr.rel (%p24) target = $region8
    $region5: #{tpu_custom_call.1} parent=1 // loop_body
      %s28 = ssub.s32 %s23, 1
      %s29 = ssub.s32 %s23, 2
      %s30 = sadd.s32 %s23, 1
      %s31 = ssub.s32 %s23, %s30
      %p32 = scmp.eq.s32.totalorder %s31, 0
      %s34 = sadd.s32 %s33, 1
      %s35 = scalar_select %p32, %s33, %s34
      %p38 = pneg %p32
      %p39 = scmp.eq.s32.totalorder %s23, 1
      %p40 = por %p38, %p39
      %p41 = scmp.ne.s32.totalorder %s33, %s36
      %p42 = scmp.eq.s32.totalorder %s23, 0
      %p43 = por %p41, %p42
      %p44 = scmp.ne.s32.totalorder %s33, %s36
      %p45 = scmp.eq.s32.totalorder %s28, 1
      %p46 = por %p44, %p45
      %p47 = scmp.ne.s32.totalorder %s36, %s37
      %p48 = scmp.eq.s32.totalorder %s28, 0
      %p49 = por %p47, %p48
      %p50 = scmp.ne.s32.totalorder %s36, %s37
      %p51 = scmp.eq.s32.totalorder %s29, 1
      %p52 = por %p50, %p51
      %p54 = scmp.ne.s32.totalorder %s37, %s53
      %p55 = scmp.eq.s32.totalorder %s29, 0
      %p56 = por %p54, %p55
      %s58 = sadd.s32 %s57, 1
      %p61 = scmp.eq.s32.totalorder %s23, 1
      %p62 = scmp.ne.s32.totalorder %s57, %s59
      %p63 = scmp.eq.s32.totalorder %s23, 0
      %p64 = por %p62, %p63
      %p65 = scmp.ne.s32.totalorder %s57, %s59
      %p66 = scmp.eq.s32.totalorder %s28, 1
      %p67 = por %p65, %p66
      %p68 = scmp.ne.s32.totalorder %s59, %s60
      %p69 = scmp.eq.s32.totalorder %s28, 0
      %p70 = por %p68, %p69
      %p71 = scmp.ne.s32.totalorder %s59, %s60
      %p72 = scmp.eq.s32.totalorder %s29, 1
      %p73 = por %p71, %p72
      %p75 = scmp.ne.s32.totalorder %s60, %s74
      %p76 = scmp.eq.s32.totalorder %s29, 0
      %p77 = por %p75, %p76
      %s79 = sadd.s32 %s78, 1
      %p82 = scmp.eq.s32.totalorder %s23, 1
      %p83 = scmp.ne.s32.totalorder %s78, %s80
      %p84 = scmp.eq.s32.totalorder %s23, 0
      %p85 = por %p83, %p84
      %p86 = scmp.ne.s32.totalorder %s78, %s80
      %p87 = scmp.eq.s32.totalorder %s28, 1
      %p88 = por %p86, %p87
      %p89 = scmp.ne.s32.totalorder %s80, %s81
      %p90 = scmp.eq.s32.totalorder %s28, 0
      %p91 = por %p89, %p90
      %p92 = scmp.ne.s32.totalorder %s80, %s81
      %p93 = scmp.eq.s32.totalorder %s29, 1
      %p94 = por %p92, %p93
      %p96 = scmp.ne.s32.totalorder %s81, %s95
      %p97 = scmp.eq.s32.totalorder %s29, 0
      %p98 = por %p96, %p97
      %s100 = sadd.s32 %s99, 1
      %p103 = scmp.eq.s32.totalorder %s23, 1
      %p104 = scmp.ne.s32.totalorder %s99, %s101
      %p105 = scmp.eq.s32.totalorder %s23, 0
      %p106 = por %p104, %p105
      %p107 = scmp.ne.s32.totalorder %s99, %s101
      %p108 = scmp.eq.s32.totalorder %s28, 1
      %p109 = por %p107, %p108
      %p110 = scmp.ne.s32.totalorder %s101, %s102
      %p111 = scmp.eq.s32.totalorder %s28, 0
      %p112 = por %p110, %p111
      %p113 = scmp.ne.s32.totalorder %s101, %s102
      %p114 = scmp.eq.s32.totalorder %s29, 1
      %p115 = por %p113, %p114
      %p117 = scmp.ne.s32.totalorder %s102, %s116
      %p118 = scmp.eq.s32.totalorder %s29, 0
      %p119 = por %p117, %p118
      %s121 = sadd.s32 %s120, 1
      %p124 = scmp.eq.s32.totalorder %s23, 1
      %p125 = scmp.ne.s32.totalorder %s120, %s122
      %p126 = scmp.eq.s32.totalorder %s23, 0
      %p127 = por %p125, %p126
      %p128 = scmp.ne.s32.totalorder %s120, %s122
      %p129 = scmp.eq.s32.totalorder %s28, 1
      %p130 = por %p128, %p129
      %p131 = scmp.ne.s32.totalorder %s122, %s123
      %p132 = scmp.eq.s32.totalorder %s28, 0
      %p133 = por %p131, %p132
      %p134 = scmp.ne.s32.totalorder %s122, %s123
      %p135 = scmp.eq.s32.totalorder %s29, 1
      %p136 = por %p134, %p135
      %p138 = scmp.ne.s32.totalorder %s123, %s137
      %p139 = scmp.eq.s32.totalorder %s29, 0
      %p140 = por %p138, %p139
      %s142 = sadd.s32 %s141, 1
      %p145 = scmp.eq.s32.totalorder %s23, 1
      %p146 = scmp.ne.s32.totalorder %s141, %s143
      %p147 = scmp.eq.s32.totalorder %s23, 0
      %p148 = por %p146, %p147
      %p149 = scmp.ne.s32.totalorder %s141, %s143
      %p150 = scmp.eq.s32.totalorder %s28, 1
      %p151 = por %p149, %p150
      %p152 = scmp.ne.s32.totalorder %s143, %s144
      %p153 = scmp.eq.s32.totalorder %s28, 0
      %p154 = por %p152, %p153
      %p155 = scmp.ne.s32.totalorder %s143, %s144
      %p156 = scmp.eq.s32.totalorder %s29, 1
      %p157 = por %p155, %p156
      %p159 = scmp.ne.s32.totalorder %s144, %s158
      %p160 = scmp.eq.s32.totalorder %s29, 0
      %p161 = por %p159, %p160
      %s163 = sadd.s32 %s162, 1
      %p166 = scmp.eq.s32.totalorder %s23, 1
      %p167 = scmp.ne.s32.totalorder %s162, %s164
      %p168 = scmp.eq.s32.totalorder %s23, 0
      %p169 = por %p167, %p168
      %p170 = scmp.ne.s32.totalorder %s162, %s164
      %p171 = scmp.eq.s32.totalorder %s28, 1
      %p172 = por %p170, %p171
      %p173 = scmp.ne.s32.totalorder %s164, %s165
      %p174 = scmp.eq.s32.totalorder %s28, 0
      %p175 = por %p173, %p174
      %p176 = scmp.ne.s32.totalorder %s164, %s165
      %p177 = scmp.eq.s32.totalorder %s29, 1
      %p178 = por %p176, %p177
      %p180 = scmp.ne.s32.totalorder %s165, %s179
      %p181 = scmp.eq.s32.totalorder %s29, 0
      %p182 = por %p180, %p181
      %s184 = sadd.s32 %s183, 1
      %p187 = scmp.eq.s32.totalorder %s23, 1
      %p188 = scmp.ne.s32.totalorder %s183, %s185
      %p189 = scmp.eq.s32.totalorder %s23, 0
      %p190 = por %p188, %p189
      %p191 = scmp.ne.s32.totalorder %s183, %s185
      %p192 = scmp.eq.s32.totalorder %s28, 1
      %p193 = por %p191, %p192
      %p194 = scmp.ne.s32.totalorder %s185, %s186
      %p195 = scmp.eq.s32.totalorder %s28, 0
      %p196 = por %p194, %p195
      %p197 = scmp.ne.s32.totalorder %s185, %s186
      %p198 = scmp.eq.s32.totalorder %s29, 1
      %p199 = por %p197, %p198
      %p201 = scmp.ne.s32.totalorder %s186, %s200
      %p202 = scmp.eq.s32.totalorder %s29, 0
      %p203 = por %p201, %p202
      %s205 = sadd.s32 %s204, 1
      %p208 = scmp.eq.s32.totalorder %s23, 1
      %p209 = scmp.ne.s32.totalorder %s204, %s206
      %p210 = scmp.eq.s32.totalorder %s23, 0
      %p211 = por %p209, %p210
      %p212 = scmp.ne.s32.totalorder %s204, %s206
      %p213 = scmp.eq.s32.totalorder %s28, 1
      %p214 = por %p212, %p213
      %p215 = scmp.ne.s32.totalorder %s206, %s207
      %p216 = scmp.eq.s32.totalorder %s28, 0
      %p217 = por %p215, %p216
      %p218 = scmp.ne.s32.totalorder %s206, %s207
      %p219 = scmp.eq.s32.totalorder %s29, 1
      %p220 = por %p218, %p219
      %p222 = scmp.ne.s32.totalorder %s207, %s221
      %p223 = scmp.eq.s32.totalorder %s29, 0
      %p224 = por %p222, %p223
      %s226 = sadd.s32 %s225, 1
      %p229 = scmp.eq.s32.totalorder %s23, 1
      %p230 = scmp.ne.s32.totalorder %s225, %s227
      %p231 = scmp.eq.s32.totalorder %s23, 0
      %p232 = por %p230, %p231
      %p233 = scmp.ne.s32.totalorder %s225, %s227
      %p234 = scmp.eq.s32.totalorder %s28, 1
      %p235 = por %p233, %p234
      %p236 = scmp.ne.s32.totalorder %s227, %s228
      %p237 = scmp.eq.s32.totalorder %s28, 0
      %p238 = por %p236, %p237
      %p239 = scmp.ne.s32.totalorder %s227, %s228
      %p240 = scmp.eq.s32.totalorder %s29, 1
      %p241 = por %p239, %p240
      %p243 = scmp.ne.s32.totalorder %s228, %s242
      %p244 = scmp.eq.s32.totalorder %s29, 0
      %p245 = por %p243, %p244
      %s247 = sadd.s32 %s246, 1
      %p250 = scmp.eq.s32.totalorder %s23, 1
      %p251 = scmp.ne.s32.totalorder %s246, %s248
      %p252 = scmp.eq.s32.totalorder %s23, 0
      %p253 = por %p251, %p252
      %p254 = scmp.ne.s32.totalorder %s246, %s248
      %p255 = scmp.eq.s32.totalorder %s28, 1
      %p256 = por %p254, %p255
      %p257 = scmp.ne.s32.totalorder %s248, %s249
      %p258 = scmp.eq.s32.totalorder %s28, 0
      %p259 = por %p257, %p258
      %p260 = scmp.ne.s32.totalorder %s248, %s249
      %p261 = scmp.eq.s32.totalorder %s29, 1
      %p262 = por %p260, %p261
      %p264 = scmp.ne.s32.totalorder %s249, %s263
      %p265 = scmp.eq.s32.totalorder %s29, 0
      %p266 = por %p264, %p265
      %s268 = sadd.s32 %s267, 1
      %p271 = scmp.eq.s32.totalorder %s23, 1
      %p272 = scmp.ne.s32.totalorder %s267, %s269
      %p273 = scmp.eq.s32.totalorder %s23, 0
      %p274 = por %p272, %p273
      %p275 = scmp.ne.s32.totalorder %s267, %s269
      %p276 = scmp.eq.s32.totalorder %s28, 1
      %p277 = por %p275, %p276
      %p278 = scmp.ne.s32.totalorder %s269, %s270
      %p279 = scmp.eq.s32.totalorder %s28, 0
      %p280 = por %p278, %p279
      %p281 = scmp.ne.s32.totalorder %s269, %s270
      %p282 = scmp.eq.s32.totalorder %s29, 1
      %p283 = por %p281, %p282
      %p285 = scmp.ne.s32.totalorder %s270, %s284
      %p286 = scmp.eq.s32.totalorder %s29, 0
      %p287 = por %p285, %p286
      %s289 = sadd.s32 %s288, 1
      %p292 = scmp.eq.s32.totalorder %s23, 1
      %p293 = scmp.ne.s32.totalorder %s288, %s290
      %p294 = scmp.eq.s32.totalorder %s23, 0
      %p295 = por %p293, %p294
      %p296 = scmp.ne.s32.totalorder %s288, %s290
      %p297 = scmp.eq.s32.totalorder %s28, 1
      %p298 = por %p296, %p297
      %p299 = scmp.ne.s32.totalorder %s290, %s291
      %p300 = scmp.eq.s32.totalorder %s28, 0
      %p301 = por %p299, %p300
      %p302 = scmp.ne.s32.totalorder %s290, %s291
      %p303 = scmp.eq.s32.totalorder %s29, 1
      %p304 = por %p302, %p303
      %p306 = scmp.ne.s32.totalorder %s291, %s305
      %p307 = scmp.eq.s32.totalorder %s29, 0
      %p308 = por %p306, %p307
      %s309 = ssub.s32 %s23, %s30
      %p310 = scmp.eq.s32.totalorder %s309, 0
      %s312 = sadd.s32 %s311, 1
      %s313 = scalar_select %p310, %s311, %s312
      %p316 = pneg %p310
      %p317 = scmp.eq.s32.totalorder %s23, 1
      %p318 = por %p316, %p317
      %p319 = scmp.ne.s32.totalorder %s311, %s314
      %p320 = scmp.eq.s32.totalorder %s23, 0
      %p321 = por %p319, %p320
      %p322 = scmp.ne.s32.totalorder %s311, %s314
      %p323 = scmp.eq.s32.totalorder %s28, 1
      %p324 = por %p322, %p323
      %p325 = scmp.ne.s32.totalorder %s314, %s315
      %p326 = scmp.eq.s32.totalorder %s28, 0
      %p327 = por %p325, %p326
      %p328 = scmp.ne.s32.totalorder %s314, %s315
      %p329 = scmp.eq.s32.totalorder %s29, 1
      %p330 = por %p328, %p329
      %p332 = scmp.ne.s32.totalorder %s315, %s331
      %p333 = scmp.eq.s32.totalorder %s29, 0
      %p334 = por %p332, %p333
      %p335 = scmp.le.s32.totalorder 1, %s23
      %p336 = scmp.lt.s32.totalorder %s23, 3
      %p337 = pnand %p335, %p336
      %p338 = pneg %p337
      // Predicated region
      $region9: #{tpu_custom_call.1} parent=5 // pred_check
        _
      $region10: #{tpu_custom_call.1} parent=5 // pred_check_branch
        %340 = sbr.rel (%p337) target = $region12
      $region11: #{tpu_custom_call.1} parent=5 // pred_region
        %s341 = ssub.s32 %s23, 1
        // Predicated region
        $region13: #{tpu_custom_call.1} parent=11 // pred_check
          %p342 = pneg %p70
        $region14: #{tpu_custom_call.1} parent=11 // pred_check_branch
          %344 = sbr.rel (%p342) target = $region16
        $region15: #{tpu_custom_call.1} parent=11 // pred_region
          _
        $region16: #{tpu_custom_call.1} parent=11 // pred_fallthru
          _
        // Predicated region
        $region17: #{tpu_custom_call.1} parent=11 // pred_check
          %p345 = pneg %p91
        $region18: #{tpu_custom_call.1} parent=11 // pred_check_branch
          %347 = sbr.rel (%p345) target = $region20
        $region19: #{tpu_custom_call.1} parent=11 // pred_region
          _
        $region20: #{tpu_custom_call.1} parent=11 // pred_fallthru
          _
        // Predicated region
        $region21: #{tpu_custom_call.1} parent=11 // pred_check
          %p348 = pneg %p112
        $region22: #{tpu_custom_call.1} parent=11 // pred_check_branch
          %350 = sbr.rel (%p348) target = $region24
        $region23: #{tpu_custom_call.1} parent=11 // pred_region
          _
        $region24: #{tpu_custom_call.1} parent=11 // pred_fallthru
          _
        // Predicated region
        $region25: #{tpu_custom_call.1} parent=11 // pred_check
          %p351 = pneg %p133
        $region26: #{tpu_custom_call.1} parent=11 // pred_check_branch
          %353 = sbr.rel (%p351) target = $region28
        $region27: #{tpu_custom_call.1} parent=11 // pred_region
          _
        $region28: #{tpu_custom_call.1} parent=11 // pred_fallthru
          _
        // Predicated region
        $region29: #{tpu_custom_call.1} parent=11 // pred_check
          %p354 = pneg %p154
        $region30: #{tpu_custom_call.1} parent=11 // pred_check_branch
          %356 = sbr.rel (%p354) target = $region32
        $region31: #{tpu_custom_call.1} parent=11 // pred_region
          _
        $region32: #{tpu_custom_call.1} parent=11 // pred_fallthru
          _
        // Predicated region
        $region33: #{tpu_custom_call.1} parent=11 // pred_check
          %p357 = pneg %p175
        $region34: #{tpu_custom_call.1} parent=11 // pred_check_branch
          %359 = sbr.rel (%p357) target = $region36
        $region35: #{tpu_custom_call.1} parent=11 // pred_region
          _
        $region36: #{tpu_custom_call.1} parent=11 // pred_fallthru
          _
        // Predicated region
        $region37: #{tpu_custom_call.1} parent=11 // pred_check
          %p360 = pneg %p196
        $region38: #{tpu_custom_call.1} parent=11 // pred_check_branch
          %362 = sbr.rel (%p360) target = $region40
        $region39: #{tpu_custom_call.1} parent=11 // pred_region
          %s364 = ssub.s32 256, 256
          %365 = vsyncadd [#allocation3], %s364
          %s366 = sshll.u32 [#allocation2], 4
          %s367 = int_to_ptr.vmem [resolvable:$true] %s366
          %372 = dma.hbm_to_vmem [thread:$0]  %s7, 256, %s367, [#allocation3], 64, 64, 4
        $region40: #{tpu_custom_call.1} parent=11 // pred_fallthru
          _
        // Predicated region
        $region41: #{tpu_custom_call.1} parent=11 // pred_check
          %p373 = pneg %p217
        $region42: #{tpu_custom_call.1} parent=11 // pred_check_branch
          %375 = sbr.rel (%p373) target = $region44
        $region43: #{tpu_custom_call.1} parent=11 // pred_region
          _
        $region44: #{tpu_custom_call.1} parent=11 // pred_fallthru
          _
        // Predicated region
        $region45: #{tpu_custom_call.1} parent=11 // pred_check
          %p376 = pneg %p238
        $region46: #{tpu_custom_call.1} parent=11 // pred_check_branch
          %378 = sbr.rel (%p376) target = $region48
        $region47: #{tpu_custom_call.1} parent=11 // pred_region
          _
        $region48: #{tpu_custom_call.1} parent=11 // pred_fallthru
          _
        // Predicated region
        $region49: #{tpu_custom_call.1} parent=11 // pred_check
          %p379 = pneg %p259
        $region50: #{tpu_custom_call.1} parent=11 // pred_check_branch
          %381 = sbr.rel (%p379) target = $region52
        $region51: #{tpu_custom_call.1} parent=11 // pred_region
          _
        $region52: #{tpu_custom_call.1} parent=11 // pred_fallthru
          _
        // Predicated region
        $region53: #{tpu_custom_call.1} parent=11 // pred_check
          %p382 = pneg %p280
        $region54: #{tpu_custom_call.1} parent=11 // pred_check_branch
          %384 = sbr.rel (%p382) target = $region56
        $region55: #{tpu_custom_call.1} parent=11 // pred_region
          _
        $region56: #{tpu_custom_call.1} parent=11 // pred_fallthru
          _
        // Predicated region
        $region57: #{tpu_custom_call.1} parent=11 // pred_check
          %p385 = pneg %p301
        $region58: #{tpu_custom_call.1} parent=11 // pred_check_branch
          %387 = sbr.rel (%p385) target = $region60
        $region59: #{tpu_custom_call.1} parent=11 // pred_region
          _
        $region60: #{tpu_custom_call.1} parent=11 // pred_fallthru
          _
      $region12: #{tpu_custom_call.1} parent=5 // pred_fallthru
        _
      %p388 = scmp.lt.s32.totalorder %s23, 2
      // Predicated region
      $region61: #{tpu_custom_call.1} parent=5 // pred_check
        %p389 = pneg %p388
      $region62: #{tpu_custom_call.1} parent=5 // pred_check_branch
        %391 = sbr.rel (%p389) target = $region64
      $region63: #{tpu_custom_call.1} parent=5 // pred_region
        // Predicated region
        $region65: #{tpu_custom_call.1} parent=63 // pred_check
          %p392 = pneg %p43
        $region66: #{tpu_custom_call.1} parent=63 // pred_check_branch
          %394 = sbr.rel (%p392) target = $region68
        $region67: #{tpu_custom_call.1} parent=63 // pred_region
          %p395 = scmp.lt.s32.totalorder %s23, 1
          %s396 = scalar_select %p395, %s23, 1
          %s397 = smul.addr %s396, 8
          %s398 = scalar_lea.vmem %s0, %s397
        $region68: #{tpu_custom_call.1} parent=63 // pred_fallthru
          _
      $region64: #{tpu_custom_call.1} parent=5 // pred_fallthru
        _
      %p399 = scmp.le.s32.totalorder 1, %s23
      %p400 = scmp.lt.s32.totalorder %s23, 3
      %p401 = pnand %p399, %p400
      %p402 = pneg %p401
      // Predicated region
      $region69: #{tpu_custom_call.1} parent=5 // pred_check
        _
      $region70: #{tpu_custom_call.1} parent=5 // pred_check_branch
        %404 = sbr.rel (%p401) target = $region72
      $region71: #{tpu_custom_call.1} parent=5 // pred_region
        %s405 = ssub.s32 %s23, 1
        // Predicated region
        $region73: #{tpu_custom_call.1} parent=71 // pred_check
          %p406 = pneg %p196
        $region74: #{tpu_custom_call.1} parent=71 // pred_check_branch
          %408 = sbr.rel (%p406) target = $region76
        $region75: #{tpu_custom_call.1} parent=71 // pred_region
          %409 = dma.done [#allocation3], 256
        $region76: #{tpu_custom_call.1} parent=71 // pred_fallthru
          _
        %p410 = scmp.lt.s32.totalorder %s28, 1
        %s411 = scalar_select %p410, %s28, 1
        %s412 = smul.addr %s411, 8
        %s413 = scalar_lea.vmem %s0, %s412
        %p414 = pneg %p49
        %p415 = pneg %p46
        %p416 = pneg %p70
        %p417 = pneg %p67
        %p418 = pneg %p91
        %p419 = pneg %p88
        %p420 = pneg %p112
        %p421 = pneg %p109
        %p422 = pneg %p133
        %p423 = pneg %p130
        %p424 = pneg %p154
        %p425 = pneg %p151
        %p426 = pneg %p175
        %p427 = pneg %p172
        %p428 = pneg %p196
        %p429 = pneg %p193
        %p430 = pneg %p217
        %p431 = pneg %p214
        %p432 = pneg %p238
        %p433 = pneg %p235
        %p434 = pneg %p259
        %p435 = pneg %p256
        %p436 = pneg %p280
        %p437 = pneg %p277
        %p438 = pneg %p301
        %p439 = pneg %p298
        %p440 = pneg %p327
        %p441 = pneg %p324
        %s442 = sand.u32 %s314, 1
        %s443 = scalar_lea.sflag [#allocation4], %s442
        %s444 = sand.u32 %s314, 1
        %s445 = smul.addr %s444, 8
        %s446 = scalar_lea.vmem [#allocation5], %s445
        %p447 = scmp.lt.s32.totalorder %s28, 1
        %s448 = scalar_select %p447, %s28, 1
        %s449 = smul.addr %s448, 8
        %s450 = scalar_lea.vmem %s0, %s449
        %v452 = vld [vmem:[%s450] sm:$0xff]
        %v453 = vpack.c.bf16 %v452, %v452
        %v454 = vld [vmem:[%s1] sm:$0xf]
        %v455 = vld [vmem:[%s1 + $0x4] sm:$0xf]
        %v456 = vld [vmem:[%s1 + $0x8] sm:$0xf]
        %v457 = vld [vmem:[%s1 + $0xc] sm:$0xf]
        %v458 = vld [vmem:[%s2] sm:$0x1]
        %v460 = vlaneseq
        %v461 = vshrl.u32 %v460, 7
        %v462 = vsub.s32 0, %v461
        %v463 = vrot.slane %v458, %v462
        %v469 = vunpack.c.l.b16 %v454
        %v470 = vunpack.c.l.b16 %v455
        %v471 = vunpack.c.l.b16 %v456
        %v472 = vunpack.c.l.b16 %v457
        %v473 = vpack.c.b16 %v470, %v469
        %v474 = vpack.c.b16 %v472, %v471
        %vm477 = vcmask 261120
        %v479 = vsel %vm477, %v453, 0
        %481 = vmatprep.subr.bf16.mxu0 0
        %482 = vmatpush1.bf16.msra.mxu0 %v473
        %483 = vmatprep.subr.bf16.mxu0 0
        %484 = vmatpush1.bf16.msra.mxu0 %v474
        %485 = vmatprep.subr.bf16.mxu0 0
        %486 = vmatpush1.bf16.msra.mxu0 0
        %487 = vmatprep.subr.bf16.mxu0 0
        %488 = vmatpush1.bf16.msra.mxu0 0
        %489 = vmatprep.subr.bf16.mxu0 0
        %490 = vmatpush1.bf16.msra.mxu0 0
        %491 = vmatprep.subr.bf16.mxu0 0
        %492 = vmatpush1.bf16.msra.mxu0 0
        %493 = vmatprep.subr.bf16.mxu0 0
        %494 = vmatpush1.bf16.msra.mxu0 0
        %495 = vmatprep.subr.bf16.mxu0 0
        %496 = vmatpush1.bf16.msra.mxu0 0
        %497 = vmatprep.subr.bf16.mxu0 0
        %498 = vmatpush1.bf16.msra.mxu0 0
        %499 = vmatprep.subr.bf16.mxu0 0
        %500 = vmatpush1.bf16.msra.mxu0 0
        %501 = vmatprep.subr.bf16.mxu0 0
        %502 = vmatpush1.bf16.msra.mxu0 0
        %503 = vmatprep.subr.bf16.mxu0 0
        %504 = vmatpush1.bf16.msra.mxu0 0
        %505 = vmatprep.subr.bf16.mxu0 0
        %506 = vmatpush1.bf16.msra.mxu0 0
        %507 = vmatprep.subr.bf16.mxu0 0
        %508 = vmatpush1.bf16.msra.mxu0 0
        %509 = vmatprep.subr.bf16.mxu0 0
        %510 = vmatpush1.bf16.msra.mxu0 0
        %511 = vmatprep.subr.bf16.mxu0 0
        %512 = vmatpush1.bf16.msra.mxu0 0
        %513 = vmatprep.mubr.bf16.mxu0 0
        %514 = vmatmul.mubr.bf16.gmra.mrb[0].mxu0 %v479
        %v515 = vpop.f32.mrb[0].mxu0
        %v516 = vadd.f32 %v463, %v515
        %v517 = vpop.f32.mrb[0].mxu0
        %v518 = vpop.f32.mrb[0].mxu0
        %v519 = vpop.f32.mrb[0].mxu0
        %520 = vdwg.mxu0
        %v521 = vmul.f32 %v516, 0.35355338
        %523 = vrot.lane.b32.xlu0 %v521, 120
        %v524 = vpop.permute.xlu0 %523
        %526 = vrot.lane.b32.xlu0 %v521, 112
        %v527 = vpop.permute.xlu0 %526
        %529 = vrot.lane.b32.xlu0 %v521, 104
        %v530 = vpop.permute.xlu0 %529
        %v532 = vcombine.low %v521, %v527
        %v533 = vcombine.high %v521, %v527
        %v535 = vunpack.c.l.s4 1983009808
        %v536 = vunpack.c.0.s8 %v535
        %v537 = vlaneseq
        %v538 = vshrl.u32 %v537, 7
        %v539 = vsub.s32 %v536, %v538
        %v540 = vrot.slane %v532, %v539
        %v542 = vunpack.c.l.s4 1983009808
        %v543 = vunpack.c.0.s8 %v542
        %v544 = vlaneseq
        %v545 = vshrl.u32 %v544, 7
        %v546 = vsub.s32 %v543, %v545
        %v547 = vrot.slane %v533, %v546
        %v548 = vcombine.low %v524, %v530
        %v549 = vcombine.high %v524, %v530
        %v551 = vunpack.c.l.s4 1983009808
        %v552 = vunpack.c.0.s8 %v551
        %v553 = vlaneseq
        %v554 = vshrl.u32 %v553, 7
        %v555 = vsub.s32 %v552, %v554
        %v556 = vrot.slane %v548, %v555
        %v558 = vunpack.c.l.s4 1983009808
        %v559 = vunpack.c.0.s8 %v558
        %v560 = vlaneseq
        %v561 = vshrl.u32 %v560, 7
        %v562 = vsub.s32 %v559, %v561
        %v563 = vrot.slane %v549, %v562
        %v564 = vcombine.low %v540, %v556
        %v565 = vcombine.high %v540, %v556
        %v567 = vunpack.c.l.s4 1934713408
        %v568 = vunpack.c.0.s8 %v567
        %v569 = vlaneseq
        %v570 = vshrl.u32 %v569, 7
        %v571 = vsub.s32 %v568, %v570
        %v572 = vrot.slane %v564, %v571
        %v574 = vunpack.c.l.s4 1934713408
        %v575 = vunpack.c.0.s8 %v574
        %v576 = vlaneseq
        %v577 = vshrl.u32 %v576, 7
        %v578 = vsub.s32 %v575, %v577
        %v579 = vrot.slane %v565, %v578
        %v580 = vcombine.low %v547, %v563
        %v581 = vcombine.high %v547, %v563
        %v583 = vunpack.c.l.s4 1934713408
        %v584 = vunpack.c.0.s8 %v583
        %v585 = vlaneseq
        %v586 = vshrl.u32 %v585, 7
        %v587 = vsub.s32 %v584, %v586
        %v588 = vrot.slane %v580, %v587
        %v590 = vunpack.c.l.s4 1934713408
        %v591 = vunpack.c.0.s8 %v590
        %v592 = vlaneseq
        %v593 = vshrl.u32 %v592, 7
        %v594 = vsub.s32 %v591, %v593
        %v595 = vrot.slane %v581, %v594
        %v596 = vcombine.high %v572, 0.0
        %v597 = vcombine.high %v579, 0.0
        %v598 = vcombine.high %v588, 0.0
        %v599 = vcombine.high %v595, 0.0
        %v600 = vcombine.low %v572, %v579
        %v602 = vunpack.c.l.s4 1983009808
        %v603 = vunpack.c.0.s8 %v602
        %v604 = vlaneseq
        %v605 = vshrl.u32 %v604, 7
        %v606 = vsub.s32 %v603, %v605
        %v607 = vrot.slane %v600, %v606
        %v608 = vcombine.low %v596, %v597
        %v610 = vunpack.c.l.s4 1983009808
        %v611 = vunpack.c.0.s8 %v610
        %v612 = vlaneseq
        %v613 = vshrl.u32 %v612, 7
        %v614 = vsub.s32 %v611, %v613
        %v615 = vrot.slane %v608, %v614
        %v616 = vcombine.low %v588, %v595
        %v618 = vunpack.c.l.s4 1983009808
        %v619 = vunpack.c.0.s8 %v618
        %v620 = vlaneseq
        %v621 = vshrl.u32 %v620, 7
        %v622 = vsub.s32 %v619, %v621
        %v623 = vrot.slane %v616, %v622
        %v624 = vcombine.low %v598, %v599
        %v626 = vunpack.c.l.s4 1983009808
        %v627 = vunpack.c.0.s8 %v626
        %v628 = vlaneseq
        %v629 = vshrl.u32 %v628, 7
        %v630 = vsub.s32 %v627, %v629
        %v631 = vrot.slane %v624, %v630
        %v632 = vcombine.low %v607, %v615
        %v633 = vcombine.high %v607, %v615
        %v635 = vunpack.c.l.s4 1934713408
        %v636 = vunpack.c.0.s8 %v635
        %v637 = vlaneseq
        %v638 = vshrl.u32 %v637, 7
        %v639 = vsub.s32 %v636, %v638
        %v640 = vrot.slane %v632, %v639
        %v642 = vunpack.c.l.s4 1934713408
        %v643 = vunpack.c.0.s8 %v642
        %v644 = vlaneseq
        %v645 = vshrl.u32 %v644, 7
        %v646 = vsub.s32 %v643, %v645
        %v647 = vrot.slane %v633, %v646
        %v648 = vcombine.low %v623, %v631
        %v649 = vcombine.high %v623, %v631
        %v651 = vunpack.c.l.s4 1934713408
        %v652 = vunpack.c.0.s8 %v651
        %v653 = vlaneseq
        %v654 = vshrl.u32 %v653, 7
        %v655 = vsub.s32 %v652, %v654
        %v656 = vrot.slane %v648, %v655
        %v658 = vunpack.c.l.s4 1934713408
        %v659 = vunpack.c.0.s8 %v658
        %v660 = vlaneseq
        %v661 = vshrl.u32 %v660, 7
        %v662 = vsub.s32 %v659, %v661
        %v663 = vrot.slane %v649, %v662
        %v664 = vcombine.low %v640, %v656
        %v665 = vcombine.high %v640, %v656
        %v666 = vcombine.low %v647, %v663
        %v667 = vcombine.high %v647, %v663
        %v668 = vpack.c.bf16 %v664, %v664
        %v669 = vpack.c.bf16 %v665, %v665
        %v670 = vpack.c.bf16 %v666, %v666
        %v671 = vpack.c.bf16 %v667, %v667
        %673 = vrot.lane.b32.xlu0 %v516, 120
        %v674 = vpop.permute.xlu0 %673
        %675 = vrot.lane.b32.xlu0 %v516, 112
        %v676 = vpop.permute.xlu0 %675
        %677 = vrot.lane.b32.xlu0 %v516, 104
        %v678 = vpop.permute.xlu0 %677
        %679 = vrot.lane.b32.xlu0 %v516, 96
        %v680 = vpop.permute.xlu0 %679
        %681 = vrot.lane.b32.xlu0 %v674, 96
        %v682 = vpop.permute.xlu0 %681
        %683 = vrot.lane.b32.xlu0 %v676, 96
        %v684 = vpop.permute.xlu0 %683
        %685 = vrot.lane.b32.xlu0 %v678, 96
        %v686 = vpop.permute.xlu0 %685
        %v691 = vcombine.low %v680, %v684
        %v692 = vcombine.high %v680, %v684
        %v694 = vunpack.c.l.s4 1983009808
        %v695 = vunpack.c.0.s8 %v694
        %v696 = vlaneseq
        %v697 = vshrl.u32 %v696, 7
        %v698 = vsub.s32 %v695, %v697
        %v699 = vrot.slane %v691, %v698
        %v701 = vunpack.c.l.s4 1983009808
        %v702 = vunpack.c.0.s8 %v701
        %v703 = vlaneseq
        %v704 = vshrl.u32 %v703, 7
        %v705 = vsub.s32 %v702, %v704
        %v706 = vrot.slane %v692, %v705
        %v707 = vcombine.low %v682, %v686
        %v708 = vcombine.high %v682, %v686
        %v710 = vunpack.c.l.s4 1983009808
        %v711 = vunpack.c.0.s8 %v710
        %v712 = vlaneseq
        %v713 = vshrl.u32 %v712, 7
        %v714 = vsub.s32 %v711, %v713
        %v715 = vrot.slane %v707, %v714
        %v717 = vunpack.c.l.s4 1983009808
        %v718 = vunpack.c.0.s8 %v717
        %v719 = vlaneseq
        %v720 = vshrl.u32 %v719, 7
        %v721 = vsub.s32 %v718, %v720
        %v722 = vrot.slane %v708, %v721
        %v723 = vcombine.low %v699, %v715
        %v724 = vcombine.high %v699, %v715
        %v726 = vunpack.c.l.s4 1934713408
        %v727 = vunpack.c.0.s8 %v726
        %v728 = vlaneseq
        %v729 = vshrl.u32 %v728, 7
        %v730 = vsub.s32 %v727, %v729
        %v731 = vrot.slane %v723, %v730
        %v733 = vunpack.c.l.s4 1934713408
        %v734 = vunpack.c.0.s8 %v733
        %v735 = vlaneseq
        %v736 = vshrl.u32 %v735, 7
        %v737 = vsub.s32 %v734, %v736
        %v738 = vrot.slane %v724, %v737
        %v739 = vcombine.low %v706, %v722
        %v740 = vcombine.high %v706, %v722
        %v742 = vunpack.c.l.s4 1934713408
        %v743 = vunpack.c.0.s8 %v742
        %v744 = vlaneseq
        %v745 = vshrl.u32 %v744, 7
        %v746 = vsub.s32 %v743, %v745
        %v747 = vrot.slane %v739, %v746
        %v749 = vunpack.c.l.s4 1934713408
        %v750 = vunpack.c.0.s8 %v749
        %v751 = vlaneseq
        %v752 = vshrl.u32 %v751, 7
        %v753 = vsub.s32 %v750, %v752
        %v754 = vrot.slane %v740, %v753
        %v755 = vcombine.high %v731, 0.0
        %v756 = vcombine.high %v738, 0.0
        %v757 = vcombine.high %v747, 0.0
        %v758 = vcombine.high %v754, 0.0
        %v759 = vcombine.low %v731, %v738
        %v761 = vunpack.c.l.s4 1983009808
        %v762 = vunpack.c.0.s8 %v761
        %v763 = vlaneseq
        %v764 = vshrl.u32 %v763, 7
        %v765 = vsub.s32 %v762, %v764
        %v766 = vrot.slane %v759, %v765
        %v767 = vcombine.low %v755, %v756
        %v769 = vunpack.c.l.s4 1983009808
        %v770 = vunpack.c.0.s8 %v769
        %v771 = vlaneseq
        %v772 = vshrl.u32 %v771, 7
        %v773 = vsub.s32 %v770, %v772
        %v774 = vrot.slane %v767, %v773
        %v775 = vcombine.low %v747, %v754
        %v777 = vunpack.c.l.s4 1983009808
        %v778 = vunpack.c.0.s8 %v777
        %v779 = vlaneseq
        %v780 = vshrl.u32 %v779, 7
        %v781 = vsub.s32 %v778, %v780
        %v782 = vrot.slane %v775, %v781
        %v783 = vcombine.low %v757, %v758
        %v785 = vunpack.c.l.s4 1983009808
        %v786 = vunpack.c.0.s8 %v785
        %v787 = vlaneseq
        %v788 = vshrl.u32 %v787, 7
        %v789 = vsub.s32 %v786, %v788
        %v790 = vrot.slane %v783, %v789
        %v791 = vcombine.low %v766, %v774
        %v792 = vcombine.high %v766, %v774
        %v794 = vunpack.c.l.s4 1934713408
        %v795 = vunpack.c.0.s8 %v794
        %v796 = vlaneseq
        %v797 = vshrl.u32 %v796, 7
        %v798 = vsub.s32 %v795, %v797
        %v799 = vrot.slane %v791, %v798
        %v801 = vunpack.c.l.s4 1934713408
        %v802 = vunpack.c.0.s8 %v801
        %v803 = vlaneseq
        %v804 = vshrl.u32 %v803, 7
        %v805 = vsub.s32 %v802, %v804
        %v806 = vrot.slane %v792, %v805
        %v807 = vcombine.low %v782, %v790
        %v808 = vcombine.high %v782, %v790
        %v810 = vunpack.c.l.s4 1934713408
        %v811 = vunpack.c.0.s8 %v810
        %v812 = vlaneseq
        %v813 = vshrl.u32 %v812, 7
        %v814 = vsub.s32 %v811, %v813
        %v815 = vrot.slane %v807, %v814
        %v817 = vunpack.c.l.s4 1934713408
        %v818 = vunpack.c.0.s8 %v817
        %v819 = vlaneseq
        %v820 = vshrl.u32 %v819, 7
        %v821 = vsub.s32 %v818, %v820
        %v822 = vrot.slane %v808, %v821
        %v823 = vcombine.low %v799, %v815
        %v824 = vcombine.high %v799, %v815
        %v825 = vcombine.low %v806, %v822
        %v826 = vcombine.high %v806, %v822
        %v827 = vpack.c.bf16 %v823, %v823
        %v828 = vpack.c.bf16 %v824, %v824
        %v829 = vpack.c.bf16 %v825, %v825
        %v830 = vpack.c.bf16 %v826, %v826
        %831 = vrot.lane.b32.xlu0 %v516, 64
        %v832 = vpop.permute.xlu0 %831
        %833 = vrot.lane.b32.xlu0 %v674, 64
        %v834 = vpop.permute.xlu0 %833
        %835 = vrot.lane.b32.xlu0 %v676, 64
        %v836 = vpop.permute.xlu0 %835
        %837 = vrot.lane.b32.xlu0 %v678, 64
        %v838 = vpop.permute.xlu0 %837
        %v843 = vcombine.low %v832, %v836
        %v844 = vcombine.high %v832, %v836
        %v846 = vunpack.c.l.s4 1983009808
        %v847 = vunpack.c.0.s8 %v846
        %v848 = vlaneseq
        %v849 = vshrl.u32 %v848, 7
        %v850 = vsub.s32 %v847, %v849
        %v851 = vrot.slane %v843, %v850
        %v853 = vunpack.c.l.s4 1983009808
        %v854 = vunpack.c.0.s8 %v853
        %v855 = vlaneseq
        %v856 = vshrl.u32 %v855, 7
        %v857 = vsub.s32 %v854, %v856
        %v858 = vrot.slane %v844, %v857
        %v859 = vcombine.low %v834, %v838
        %v860 = vcombine.high %v834, %v838
        %v862 = vunpack.c.l.s4 1983009808
        %v863 = vunpack.c.0.s8 %v862
        %v864 = vlaneseq
        %v865 = vshrl.u32 %v864, 7
        %v866 = vsub.s32 %v863, %v865
        %v867 = vrot.slane %v859, %v866
        %v869 = vunpack.c.l.s4 1983009808
        %v870 = vunpack.c.0.s8 %v869
        %v871 = vlaneseq
        %v872 = vshrl.u32 %v871, 7
        %v873 = vsub.s32 %v870, %v872
        %v874 = vrot.slane %v860, %v873
        %v875 = vcombine.low %v851, %v867
        %v876 = vcombine.high %v851, %v867
        %v878 = vunpack.c.l.s4 1934713408
        %v879 = vunpack.c.0.s8 %v878
        %v880 = vlaneseq
        %v881 = vshrl.u32 %v880, 7
        %v882 = vsub.s32 %v879, %v881
        %v883 = vrot.slane %v875, %v882
        %v885 = vunpack.c.l.s4 1934713408
        %v886 = vunpack.c.0.s8 %v885
        %v887 = vlaneseq
        %v888 = vshrl.u32 %v887, 7
        %v889 = vsub.s32 %v886, %v888
        %v890 = vrot.slane %v876, %v889
        %v891 = vcombine.low %v858, %v874
        %v892 = vcombine.high %v858, %v874
        %v894 = vunpack.c.l.s4 1934713408
        %v895 = vunpack.c.0.s8 %v894
        %v896 = vlaneseq
        %v897 = vshrl.u32 %v896, 7
        %v898 = vsub.s32 %v895, %v897
        %v899 = vrot.slane %v891, %v898
        %v901 = vunpack.c.l.s4 1934713408
        %v902 = vunpack.c.0.s8 %v901
        %v903 = vlaneseq
        %v904 = vshrl.u32 %v903, 7
        %v905 = vsub.s32 %v902, %v904
        %v906 = vrot.slane %v892, %v905
        %v907 = vcombine.high %v883, 0.0
        %v908 = vcombine.high %v890, 0.0
        %v909 = vcombine.high %v899, 0.0
        %v910 = vcombine.high %v906, 0.0
        %v911 = vcombine.low %v883, %v890
        %v913 = vunpack.c.l.s4 1983009808
        %v914 = vunpack.c.0.s8 %v913
        %v915 = vlaneseq
        %v916 = vshrl.u32 %v915, 7
        %v917 = vsub.s32 %v914, %v916
        %v918 = vrot.slane %v911, %v917
        %v919 = vcombine.low %v907, %v908
        %v921 = vunpack.c.l.s4 1983009808
        %v922 = vunpack.c.0.s8 %v921
        %v923 = vlaneseq
        %v924 = vshrl.u32 %v923, 7
        %v925 = vsub.s32 %v922, %v924
        %v926 = vrot.slane %v919, %v925
        %v927 = vcombine.low %v899, %v906
        %v929 = vunpack.c.l.s4 1983009808
        %v930 = vunpack.c.0.s8 %v929
        %v931 = vlaneseq
        %v932 = vshrl.u32 %v931, 7
        %v933 = vsub.s32 %v930, %v932
        %v934 = vrot.slane %v927, %v933
        %v935 = vcombine.low %v909, %v910
        %v937 = vunpack.c.l.s4 1983009808
        %v938 = vunpack.c.0.s8 %v937
        %v939 = vlaneseq
        %v940 = vshrl.u32 %v939, 7
        %v941 = vsub.s32 %v938, %v940
        %v942 = vrot.slane %v935, %v941
        %v943 = vcombine.low %v918, %v926
        %v944 = vcombine.high %v918, %v926
        %v946 = vunpack.c.l.s4 1934713408
        %v947 = vunpack.c.0.s8 %v946
        %v948 = vlaneseq
        %v949 = vshrl.u32 %v948, 7
        %v950 = vsub.s32 %v947, %v949
        %v951 = vrot.slane %v943, %v950
        %v953 = vunpack.c.l.s4 1934713408
        %v954 = vunpack.c.0.s8 %v953
        %v955 = vlaneseq
        %v956 = vshrl.u32 %v955, 7
        %v957 = vsub.s32 %v954, %v956
        %v958 = vrot.slane %v944, %v957
        %v959 = vcombine.low %v934, %v942
        %v960 = vcombine.high %v934, %v942
        %v962 = vunpack.c.l.s4 1934713408
        %v963 = vunpack.c.0.s8 %v962
        %v964 = vlaneseq
        %v965 = vshrl.u32 %v964, 7
        %v966 = vsub.s32 %v963, %v965
        %v967 = vrot.slane %v959, %v966
        %v969 = vunpack.c.l.s4 1934713408
        %v970 = vunpack.c.0.s8 %v969
        %v971 = vlaneseq
        %v972 = vshrl.u32 %v971, 7
        %v973 = vsub.s32 %v970, %v972
        %v974 = vrot.slane %v960, %v973
        %v975 = vcombine.low %v951, %v967
        %v976 = vcombine.high %v951, %v967
        %v977 = vcombine.low %v958, %v974
        %v978 = vcombine.high %v958, %v974
        %v979 = vpack.c.bf16 %v975, %v975
        %v980 = vpack.c.bf16 %v976, %v976
        %v981 = vpack.c.bf16 %v977, %v977
        %v982 = vpack.c.bf16 %v978, %v978
        %vm983 = vcmask 64512
        %v985 = vsel %vm983, %v668, 0
        %v988 = vsel %vm983, %v827, 0
        %990 = vmatprep.subr.bf16.mxu0 0
        %991 = vmatpush1.bf16.xpose.msra.mxu0 %v988
        %992 = vmatprep.subr.bf16.mxu0 0
        %993 = vmatpush1.bf16.xpose.msra.mxu0 0
        %994 = vmatprep.subr.bf16.mxu0 0
        %995 = vmatpush1.bf16.xpose.msra.mxu0 0
        %996 = vmatprep.subr.bf16.mxu0 0
        %997 = vmatpush1.bf16.xpose.msra.mxu0 0
        %998 = vmatprep.subr.bf16.mxu0 0
        %999 = vmatpush1.bf16.xpose.msra.mxu0 0
        %1000 = vmatprep.subr.bf16.mxu0 0
        %1001 = vmatpush1.bf16.xpose.msra.mxu0 0
        %1002 = vmatprep.subr.bf16.mxu0 0
        %1003 = vmatpush1.bf16.xpose.msra.mxu0 0
        %1004 = vmatprep.subr.bf16.mxu0 0
        %1005 = vmatpush1.bf16.xpose.msra.mxu0 0
        %1006 = vmatprep.subr.bf16.mxu0 0
        %1007 = vmatpush1.bf16.xpose.msra.mxu0 0
        %1008 = vmatprep.subr.bf16.mxu0 0
        %1009 = vmatpush1.bf16.xpose.msra.mxu0 0
        %1010 = vmatprep.subr.bf16.mxu0 0
        %1011 = vmatpush1.bf16.xpose.msra.mxu0 0
        %1012 = vmatprep.subr.bf16.mxu0 0
        %1013 = vmatpush1.bf16.xpose.msra.mxu0 0
        %1014 = vmatprep.subr.bf16.mxu0 0
        %1015 = vmatpush1.bf16.xpose.msra.mxu0 0
        %1016 = vmatprep.subr.bf16.mxu0 0
        %1017 = vmatpush1.bf16.xpose.msra.mxu0 0
        %1018 = vmatprep.subr.bf16.mxu0 0
        %1019 = vmatpush1.bf16.xpose.msra.mxu0 0
        %1020 = vmatprep.subr.bf16.mxu0 0
        %1021 = vmatpush1.bf16.xpose.msra.mxu0 0
        %1022 = vmatprep.mubr.bf16.mxu0 0
        %1023 = vmatmul.mubr.bf16.gmra.mrb[0].mxu0 %v985
        %v1024 = vpop.f32.mrb[0].mxu0
        %v1025 = vadd.f32 0.0, %v1024
        %v1026 = vpop.f32.mrb[0].mxu0
        %v1027 = vpop.f32.mrb[0].mxu0
        %v1028 = vpop.f32.mrb[0].mxu0
        %1029 = vdwg.mxu0
        %v1031 = vsel %vm983, %v669, 0
        %v1034 = vsel %vm983, %v828, 0
        %1036 = vmatprep.subr.bf16.mxu0 0
        %1037 = vmatpush1.bf16.xpose.msra.mxu0 %v1034
        %1038 = vmatprep.subr.bf16.mxu0 0
        %1039 = vmatpush1.bf16.xpose.msra.mxu0 0
        %1040 = vmatprep.subr.bf16.mxu0 0
        %1041 = vmatpush1.bf16.xpose.msra.mxu0 0
        %1042 = vmatprep.subr.bf16.mxu0 0
        %1043 = vmatpush1.bf16.xpose.msra.mxu0 0
        %1044 = vmatprep.subr.bf16.mxu0 0
        %1045 = vmatpush1.bf16.xpose.msra.mxu0 0
        %1046 = vmatprep.subr.bf16.mxu0 0
        %1047 = vmatpush1.bf16.xpose.msra.mxu0 0
        %1048 = vmatprep.subr.bf16.mxu0 0
        %1049 = vmatpush1.bf16.xpose.msra.mxu0 0
        %1050 = vmatprep.subr.bf16.mxu0 0
        %1051 = vmatpush1.bf16.xpose.msra.mxu0 0
        %1052 = vmatprep.subr.bf16.mxu0 0
        %1053 = vmatpush1.bf16.xpose.msra.mxu0 0
        %1054 = vmatprep.subr.bf16.mxu0 0
        %1055 = vmatpush1.bf16.xpose.msra.mxu0 0
        %1056 = vmatprep.subr.bf16.mxu0 0
        %1057 = vmatpush1.bf16.xpose.msra.mxu0 0
        %1058 = vmatprep.subr.bf16.mxu0 0
        %1059 = vmatpush1.bf16.xpose.msra.mxu0 0
        %1060 = vmatprep.subr.bf16.mxu0 0
        %1061 = vmatpush1.bf16.xpose.msra.mxu0 0
        %1062 = vmatprep.subr.bf16.mxu0 0
        %1063 = vmatpush1.bf16.xpose.msra.mxu0 0
        %1064 = vmatprep.subr.bf16.mxu0 0
        %1065 = vmatpush1.bf16.xpose.msra.mxu0 0
        %1066 = vmatprep.subr.bf16.mxu0 0
        %1067 = vmatpush1.bf16.xpose.msra.mxu0 0
        %1068 = vmatprep.mubr.bf16.mxu0 0
        %1069 = vmatmul.mubr.bf16.gmra.mrb[0].mxu0 %v1031
        %v1070 = vpop.f32.mrb[0].mxu0
        %v1071 = vadd.f32 0.0, %v1070
        %v1072 = vpop.f32.mrb[0].mxu0
        %v1073 = vpop.f32.mrb[0].mxu0
        %v1074 = vpop.f32.mrb[0].mxu0
        %1075 = vdwg.mxu0
        %v1077 = vsel %vm983, %v670, 0
        %v1080 = vsel %vm983, %v829, 0
        %1082 = vmatprep.subr.bf16.mxu0 0
        %1083 = vmatpush1.bf16.xpose.msra.mxu0 %v1080
        %1084 = vmatprep.subr.bf16.mxu0 0
        %1085 = vmatpush1.bf16.xpose.msra.mxu0 0
        %1086 = vmatprep.subr.bf16.mxu0 0
        %1087 = vmatpush1.bf16.xpose.msra.mxu0 0
        %1088 = vmatprep.subr.bf16.mxu0 0
        %1089 = vmatpush1.bf16.xpose.msra.mxu0 0
        %1090 = vmatprep.subr.bf16.mxu0 0
        %1091 = vmatpush1.bf16.xpose.msra.mxu0 0
        %1092 = vmatprep.subr.bf16.mxu0 0
        %1093 = vmatpush1.bf16.xpose.msra.mxu0 0
        %1094 = vmatprep.subr.bf16.mxu0 0
        %1095 = vmatpush1.bf16.xpose.msra.mxu0 0
        %1096 = vmatprep.subr.bf16.mxu0 0
        %1097 = vmatpush1.bf16.xpose.msra.mxu0 0
        %1098 = vmatprep.subr.bf16.mxu0 0
        %1099 = vmatpush1.bf16.xpose.msra.mxu0 0
        %1100 = vmatprep.subr.bf16.mxu0 0
        %1101 = vmatpush1.bf16.xpose.msra.mxu0 0
        %1102 = vmatprep.subr.bf16.mxu0 0
        %1103 = vmatpush1.bf16.xpose.msra.mxu0 0
        %1104 = vmatprep.subr.bf16.mxu0 0
        %1105 = vmatpush1.bf16.xpose.msra.mxu0 0
        %1106 = vmatprep.subr.bf16.mxu0 0
        %1107 = vmatpush1.bf16.xpose.msra.mxu0 0
        %1108 = vmatprep.subr.bf16.mxu0 0
        %1109 = vmatpush1.bf16.xpose.msra.mxu0 0
        %1110 = vmatprep.subr.bf16.mxu0 0
        %1111 = vmatpush1.bf16.xpose.msra.mxu0 0
        %1112 = vmatprep.subr.bf16.mxu0 0
        %1113 = vmatpush1.bf16.xpose.msra.mxu0 0
        %1114 = vmatprep.mubr.bf16.mxu0 0
        %1115 = vmatmul.mubr.bf16.gmra.mrb[0].mxu0 %v1077
        %v1116 = vpop.f32.mrb[0].mxu0
        %v1117 = vadd.f32 0.0, %v1116
        %v1118 = vpop.f32.mrb[0].mxu0
        %v1119 = vpop.f32.mrb[0].mxu0
        %v1120 = vpop.f32.mrb[0].mxu0
        %1121 = vdwg.mxu0
        %v1123 = vsel %vm983, %v671, 0
        %v1126 = vsel %vm983, %v830, 0
        %1128 = vmatprep.subr.bf16.mxu0 0
        %1129 = vmatpush1.bf16.xpose.msra.mxu0 %v1126
        %1130 = vmatprep.subr.bf16.mxu0 0
        %1131 = vmatpush1.bf16.xpose.msra.mxu0 0
        %1132 = vmatprep.subr.bf16.mxu0 0
        %1133 = vmatpush1.bf16.xpose.msra.mxu0 0
        %1134 = vmatprep.subr.bf16.mxu0 0
        %1135 = vmatpush1.bf16.xpose.msra.mxu0 0
        %1136 = vmatprep.subr.bf16.mxu0 0
        %1137 = vmatpush1.bf16.xpose.msra.mxu0 0
        %1138 = vmatprep.subr.bf16.mxu0 0
        %1139 = vmatpush1.bf16.xpose.msra.mxu0 0
        %1140 = vmatprep.subr.bf16.mxu0 0
        %1141 = vmatpush1.bf16.xpose.msra.mxu0 0
        %1142 = vmatprep.subr.bf16.mxu0 0
        %1143 = vmatpush1.bf16.xpose.msra.mxu0 0
        %1144 = vmatprep.subr.bf16.mxu0 0
        %1145 = vmatpush1.bf16.xpose.msra.mxu0 0
        %1146 = vmatprep.subr.bf16.mxu0 0
        %1147 = vmatpush1.bf16.xpose.msra.mxu0 0
        %1148 = vmatprep.subr.bf16.mxu0 0
        %1149 = vmatpush1.bf16.xpose.msra.mxu0 0
        %1150 = vmatprep.subr.bf16.mxu0 0
        %1151 = vmatpush1.bf16.xpose.msra.mxu0 0
        %1152 = vmatprep.subr.bf16.mxu0 0
        %1153 = vmatpush1.bf16.xpose.msra.mxu0 0
        %1154 = vmatprep.subr.bf16.mxu0 0
        %1155 = vmatpush1.bf16.xpose.msra.mxu0 0
        %1156 = vmatprep.subr.bf16.mxu0 0
        %1157 = vmatpush1.bf16.xpose.msra.mxu0 0
        %1158 = vmatprep.subr.bf16.mxu0 0
        %1159 = vmatpush1.bf16.xpose.msra.mxu0 0
        %1160 = vmatprep.mubr.bf16.mxu0 0
        %1161 = vmatmul.mubr.bf16.gmra.mrb[0].mxu0 %v1123
        %v1162 = vpop.f32.mrb[0].mxu0
        %v1163 = vadd.f32 0.0, %v1162
        %v1164 = vpop.f32.mrb[0].mxu0
        %v1165 = vpop.f32.mrb[0].mxu0
        %v1166 = vpop.f32.mrb[0].mxu0
        %1167 = vdwg.mxu0
        %v1168 = vsel %vm983, %v1025, -inf
        %1169 = vmax.xlane.f32.xlu0 %v1168
        %v1170 = vpop.xlane.xlu0 %1169
        %v1171 = vsel %vm983, %v1071, -inf
        %1172 = vmax.xlane.f32.xlu0 %v1171
        %v1173 = vpop.xlane.xlu0 %1172
        %v1174 = vsel %vm983, %v1117, -inf
        %1175 = vmax.xlane.f32.xlu0 %v1174
        %v1176 = vpop.xlane.xlu0 %1175
        %v1177 = vsel %vm983, %v1163, -inf
        %1178 = vmax.xlane.f32.xlu0 %v1177
        %v1179 = vpop.xlane.xlu0 %1178
        %v1180 = vsub.f32 %v1025, %v1170
        %v1181 = vsub.f32 %v1071, %v1173
        %v1182 = vsub.f32 %v1117, %v1176
        %v1183 = vsub.f32 %v1163, %v1179
        %v1184 = vmul.f32 %v1180, 1.442695
        %v1185 = vpow.pop %v1184
        %v1186 = vmul.f32 %v1181, 1.442695
        %v1187 = vpow.pop %v1186
        %v1188 = vmul.f32 %v1182, 1.442695
        %v1189 = vpow.pop %v1188
        %v1190 = vmul.f32 %v1183, 1.442695
        %v1191 = vpow.pop %v1190
        %v1192 = vsel %vm983, %v1185, 0.0
        %1193 = vadd.xlane.f32.xlu0 %v1192
        %v1194 = vpop.xlane.xlu0 %1193
        %v1195 = vsel %vm983, %v1187, 0.0
        %1196 = vadd.xlane.f32.xlu0 %v1195
        %v1197 = vpop.xlane.xlu0 %1196
        %v1198 = vsel %vm983, %v1189, 0.0
        %1199 = vadd.xlane.f32.xlu0 %v1198
        %v1200 = vpop.xlane.xlu0 %1199
        %v1201 = vsel %vm983, %v1191, 0.0
        %1202 = vadd.xlane.f32.xlu0 %v1201
        %v1203 = vpop.xlane.xlu0 %1202
        %v1204 = vrcp.pop %v1194
        %v1205 = vrcp.pop %v1197
        %v1206 = vrcp.pop %v1200
        %v1207 = vrcp.pop %v1203
        %v1208 = vmul.f32 %v1185, %v1204
        %v1209 = vmul.f32 %v1187, %v1205
        %v1210 = vmul.f32 %v1189, %v1206
        %v1211 = vmul.f32 %v1191, %v1207
        %v1212 = vpack.c.bf16 %v1208, %v1208
        %v1213 = vpack.c.bf16 %v1209, %v1209
        %v1214 = vpack.c.bf16 %v1210, %v1210
        %v1215 = vpack.c.bf16 %v1211, %v1211
        %v1217 = vsel %vm983, %v1212, 0
        %vm1219 = vcmask 1043456
        %v1221 = vsel %vm1219, %v979, 0
        %1223 = vmatprep.subr.bf16.mxu0 0
        %1224 = vmatpush1.bf16.msra.mxu0 %v1221
        %1225 = vmatprep.subr.bf16.mxu0 0
        %1226 = vmatpush1.bf16.msra.mxu0 0
        %1227 = vmatprep.subr.bf16.mxu0 0
        %1228 = vmatpush1.bf16.msra.mxu0 0
        %1229 = vmatprep.subr.bf16.mxu0 0
        %1230 = vmatpush1.bf16.msra.mxu0 0
        %1231 = vmatprep.subr.bf16.mxu0 0
        %1232 = vmatpush1.bf16.msra.mxu0 0
        %1233 = vmatprep.subr.bf16.mxu0 0
        %1234 = vmatpush1.bf16.msra.mxu0 0
        %1235 = vmatprep.subr.bf16.mxu0 0
        %1236 = vmatpush1.bf16.msra.mxu0 0
        %1237 = vmatprep.subr.bf16.mxu0 0
        %1238 = vmatpush1.bf16.msra.mxu0 0
        %1239 = vmatprep.subr.bf16.mxu0 0
        %1240 = vmatpush1.bf16.msra.mxu0 0
        %1241 = vmatprep.subr.bf16.mxu0 0
        %1242 = vmatpush1.bf16.msra.mxu0 0
        %1243 = vmatprep.subr.bf16.mxu0 0
        %1244 = vmatpush1.bf16.msra.mxu0 0
        %1245 = vmatprep.subr.bf16.mxu0 0
        %1246 = vmatpush1.bf16.msra.mxu0 0
        %1247 = vmatprep.subr.bf16.mxu0 0
        %1248 = vmatpush1.bf16.msra.mxu0 0
        %1249 = vmatprep.subr.bf16.mxu0 0
        %1250 = vmatpush1.bf16.msra.mxu0 0
        %1251 = vmatprep.subr.bf16.mxu0 0
        %1252 = vmatpush1.bf16.msra.mxu0 0
        %1253 = vmatprep.subr.bf16.mxu0 0
        %1254 = vmatpush1.bf16.msra.mxu0 0
        %1255 = vmatprep.mubr.bf16.mxu0 0
        %1256 = vmatmul.mubr.bf16.gmra.mrb[0].mxu0 %v1217
        %v1257 = vpop.f32.mrb[0].mxu0
        %v1258 = vadd.f32 0.0, %v1257
        %v1259 = vpop.f32.mrb[0].mxu0
        %v1260 = vpop.f32.mrb[0].mxu0
        %v1261 = vpop.f32.mrb[0].mxu0
        %1262 = vdwg.mxu0
        %v1264 = vsel %vm983, %v1213, 0
        %v1267 = vsel %vm1219, %v980, 0
        %1269 = vmatprep.subr.bf16.mxu0 0
        %1270 = vmatpush1.bf16.msra.mxu0 %v1267
        %1271 = vmatprep.subr.bf16.mxu0 0
        %1272 = vmatpush1.bf16.msra.mxu0 0
        %1273 = vmatprep.subr.bf16.mxu0 0
        %1274 = vmatpush1.bf16.msra.mxu0 0
        %1275 = vmatprep.subr.bf16.mxu0 0
        %1276 = vmatpush1.bf16.msra.mxu0 0
        %1277 = vmatprep.subr.bf16.mxu0 0
        %1278 = vmatpush1.bf16.msra.mxu0 0
        %1279 = vmatprep.subr.bf16.mxu0 0
        %1280 = vmatpush1.bf16.msra.mxu0 0
        %1281 = vmatprep.subr.bf16.mxu0 0
        %1282 = vmatpush1.bf16.msra.mxu0 0
        %1283 = vmatprep.subr.bf16.mxu0 0
        %1284 = vmatpush1.bf16.msra.mxu0 0
        %1285 = vmatprep.subr.bf16.mxu0 0
        %1286 = vmatpush1.bf16.msra.mxu0 0
        %1287 = vmatprep.subr.bf16.mxu0 0
        %1288 = vmatpush1.bf16.msra.mxu0 0
        %1289 = vmatprep.subr.bf16.mxu0 0
        %1290 = vmatpush1.bf16.msra.mxu0 0
        %1291 = vmatprep.subr.bf16.mxu0 0
        %1292 = vmatpush1.bf16.msra.mxu0 0
        %1293 = vmatprep.subr.bf16.mxu0 0
        %1294 = vmatpush1.bf16.msra.mxu0 0
        %1295 = vmatprep.subr.bf16.mxu0 0
        %1296 = vmatpush1.bf16.msra.mxu0 0
        %1297 = vmatprep.subr.bf16.mxu0 0
        %1298 = vmatpush1.bf16.msra.mxu0 0
        %1299 = vmatprep.subr.bf16.mxu0 0
        %1300 = vmatpush1.bf16.msra.mxu0 0
        %1301 = vmatprep.mubr.bf16.mxu0 0
        %1302 = vmatmul.mubr.bf16.gmra.mrb[0].mxu0 %v1264
        %v1303 = vpop.f32.mrb[0].mxu0
        %v1304 = vadd.f32 0.0, %v1303
        %v1305 = vpop.f32.mrb[0].mxu0
        %v1306 = vpop.f32.mrb[0].mxu0
        %v1307 = vpop.f32.mrb[0].mxu0
        %1308 = vdwg.mxu0
        %v1310 = vsel %vm983, %v1214, 0
        %v1313 = vsel %vm1219, %v981, 0
        %1315 = vmatprep.subr.bf16.mxu0 0
        %1316 = vmatpush1.bf16.msra.mxu0 %v1313
        %1317 = vmatprep.subr.bf16.mxu0 0
        %1318 = vmatpush1.bf16.msra.mxu0 0
        %1319 = vmatprep.subr.bf16.mxu0 0
        %1320 = vmatpush1.bf16.msra.mxu0 0
        %1321 = vmatprep.subr.bf16.mxu0 0
        %1322 = vmatpush1.bf16.msra.mxu0 0
        %1323 = vmatprep.subr.bf16.mxu0 0
        %1324 = vmatpush1.bf16.msra.mxu0 0
        %1325 = vmatprep.subr.bf16.mxu0 0
        %1326 = vmatpush1.bf16.msra.mxu0 0
        %1327 = vmatprep.subr.bf16.mxu0 0
        %1328 = vmatpush1.bf16.msra.mxu0 0
        %1329 = vmatprep.subr.bf16.mxu0 0
        %1330 = vmatpush1.bf16.msra.mxu0 0
        %1331 = vmatprep.subr.bf16.mxu0 0
        %1332 = vmatpush1.bf16.msra.mxu0 0
        %1333 = vmatprep.subr.bf16.mxu0 0
        %1334 = vmatpush1.bf16.msra.mxu0 0
        %1335 = vmatprep.subr.bf16.mxu0 0
        %1336 = vmatpush1.bf16.msra.mxu0 0
        %1337 = vmatprep.subr.bf16.mxu0 0
        %1338 = vmatpush1.bf16.msra.mxu0 0
        %1339 = vmatprep.subr.bf16.mxu0 0
        %1340 = vmatpush1.bf16.msra.mxu0 0
        %1341 = vmatprep.subr.bf16.mxu0 0
        %1342 = vmatpush1.bf16.msra.mxu0 0
        %1343 = vmatprep.subr.bf16.mxu0 0
        %1344 = vmatpush1.bf16.msra.mxu0 0
        %1345 = vmatprep.subr.bf16.mxu0 0
        %1346 = vmatpush1.bf16.msra.mxu0 0
        %1347 = vmatprep.mubr.bf16.mxu0 0
        %1348 = vmatmul.mubr.bf16.gmra.mrb[0].mxu0 %v1310
        %v1349 = vpop.f32.mrb[0].mxu0
        %v1350 = vadd.f32 0.0, %v1349
        %v1351 = vpop.f32.mrb[0].mxu0
        %v1352 = vpop.f32.mrb[0].mxu0
        %v1353 = vpop.f32.mrb[0].mxu0
        %1354 = vdwg.mxu0
        %v1356 = vsel %vm983, %v1215, 0
        %v1359 = vsel %vm1219, %v982, 0
        %1361 = vmatprep.subr.bf16.mxu0 0
        %1362 = vmatpush1.bf16.msra.mxu0 %v1359
        %1363 = vmatprep.subr.bf16.mxu0 0
        %1364 = vmatpush1.bf16.msra.mxu0 0
        %1365 = vmatprep.subr.bf16.mxu0 0
        %1366 = vmatpush1.bf16.msra.mxu0 0
        %1367 = vmatprep.subr.bf16.mxu0 0
        %1368 = vmatpush1.bf16.msra.mxu0 0
        %1369 = vmatprep.subr.bf16.mxu0 0
        %1370 = vmatpush1.bf16.msra.mxu0 0
        %1371 = vmatprep.subr.bf16.mxu0 0
        %1372 = vmatpush1.bf16.msra.mxu0 0
        %1373 = vmatprep.subr.bf16.mxu0 0
        %1374 = vmatpush1.bf16.msra.mxu0 0
        %1375 = vmatprep.subr.bf16.mxu0 0
        %1376 = vmatpush1.bf16.msra.mxu0 0
        %1377 = vmatprep.subr.bf16.mxu0 0
        %1378 = vmatpush1.bf16.msra.mxu0 0
        %1379 = vmatprep.subr.bf16.mxu0 0
        %1380 = vmatpush1.bf16.msra.mxu0 0
        %1381 = vmatprep.subr.bf16.mxu0 0
        %1382 = vmatpush1.bf16.msra.mxu0 0
        %1383 = vmatprep.subr.bf16.mxu0 0
        %1384 = vmatpush1.bf16.msra.mxu0 0
        %1385 = vmatprep.subr.bf16.mxu0 0
        %1386 = vmatpush1.bf16.msra.mxu0 0
        %1387 = vmatprep.subr.bf16.mxu0 0
        %1388 = vmatpush1.bf16.msra.mxu0 0
        %1389 = vmatprep.subr.bf16.mxu0 0
        %1390 = vmatpush1.bf16.msra.mxu0 0
        %1391 = vmatprep.subr.bf16.mxu0 0
        %1392 = vmatpush1.bf16.msra.mxu0 0
        %1393 = vmatprep.mubr.bf16.mxu0 0
        %1394 = vmatmul.mubr.bf16.gmra.mrb[0].mxu0 %v1356
        %v1395 = vpop.f32.mrb[0].mxu0
        %v1396 = vadd.f32 0.0, %v1395
        %v1397 = vpop.f32.mrb[0].mxu0
        %v1398 = vpop.f32.mrb[0].mxu0
        %v1399 = vpop.f32.mrb[0].mxu0
        %1400 = vdwg.mxu0
        %v1401 = vcombine.low %v1258, %v1350
        %v1402 = vcombine.high %v1258, %v1350
        %v1404 = vunpack.c.l.s4 1983009808
        %v1405 = vunpack.c.0.s8 %v1404
        %v1406 = vlaneseq
        %v1407 = vshrl.u32 %v1406, 7
        %v1408 = vsub.s32 %v1405, %v1407
        %v1409 = vrot.slane %v1401, %v1408
        %v1411 = vunpack.c.l.s4 1983009808
        %v1412 = vunpack.c.0.s8 %v1411
        %v1413 = vlaneseq
        %v1414 = vshrl.u32 %v1413, 7
        %v1415 = vsub.s32 %v1412, %v1414
        %v1416 = vrot.slane %v1402, %v1415
        %v1417 = vcombine.low %v1304, %v1396
        %v1418 = vcombine.high %v1304, %v1396
        %v1420 = vunpack.c.l.s4 1983009808
        %v1421 = vunpack.c.0.s8 %v1420
        %v1422 = vlaneseq
        %v1423 = vshrl.u32 %v1422, 7
        %v1424 = vsub.s32 %v1421, %v1423
        %v1425 = vrot.slane %v1417, %v1424
        %v1427 = vunpack.c.l.s4 1983009808
        %v1428 = vunpack.c.0.s8 %v1427
        %v1429 = vlaneseq
        %v1430 = vshrl.u32 %v1429, 7
        %v1431 = vsub.s32 %v1428, %v1430
        %v1432 = vrot.slane %v1418, %v1431
        %v1433 = vcombine.low %v1409, %v1425
        %v1434 = vcombine.high %v1409, %v1425
        %v1436 = vunpack.c.l.s4 1934713408
        %v1437 = vunpack.c.0.s8 %v1436
        %v1438 = vlaneseq
        %v1439 = vshrl.u32 %v1438, 7
        %v1440 = vsub.s32 %v1437, %v1439
        %v1441 = vrot.slane %v1433, %v1440
        %v1443 = vunpack.c.l.s4 1934713408
        %v1444 = vunpack.c.0.s8 %v1443
        %v1445 = vlaneseq
        %v1446 = vshrl.u32 %v1445, 7
        %v1447 = vsub.s32 %v1444, %v1446
        %v1448 = vrot.slane %v1434, %v1447
        %v1449 = vcombine.low %v1416, %v1432
        %v1450 = vcombine.high %v1416, %v1432
        %v1452 = vunpack.c.l.s4 1934713408
        %v1453 = vunpack.c.0.s8 %v1452
        %v1454 = vlaneseq
        %v1455 = vshrl.u32 %v1454, 7
        %v1456 = vsub.s32 %v1453, %v1455
        %v1457 = vrot.slane %v1449, %v1456
        %v1459 = vunpack.c.l.s4 1934713408
        %v1460 = vunpack.c.0.s8 %v1459
        %v1461 = vlaneseq
        %v1462 = vshrl.u32 %v1461, 7
        %v1463 = vsub.s32 %v1460, %v1462
        %v1464 = vrot.slane %v1450, %v1463
        %v1465 = vcombine.high %v1441, 0.0
        %v1466 = vcombine.high %v1448, 0.0
        %v1467 = vcombine.high %v1457, 0.0
        %v1468 = vcombine.high %v1464, 0.0
        %v1469 = vcombine.low %v1441, %v1448
        %v1471 = vunpack.c.l.s4 1983009808
        %v1472 = vunpack.c.0.s8 %v1471
        %v1473 = vlaneseq
        %v1474 = vshrl.u32 %v1473, 7
        %v1475 = vsub.s32 %v1472, %v1474
        %v1476 = vrot.slane %v1469, %v1475
        %v1477 = vcombine.low %v1465, %v1466
        %v1479 = vunpack.c.l.s4 1983009808
        %v1480 = vunpack.c.0.s8 %v1479
        %v1481 = vlaneseq
        %v1482 = vshrl.u32 %v1481, 7
        %v1483 = vsub.s32 %v1480, %v1482
        %v1484 = vrot.slane %v1477, %v1483
        %v1485 = vcombine.low %v1457, %v1464
        %v1487 = vunpack.c.l.s4 1983009808
        %v1488 = vunpack.c.0.s8 %v1487
        %v1489 = vlaneseq
        %v1490 = vshrl.u32 %v1489, 7
        %v1491 = vsub.s32 %v1488, %v1490
        %v1492 = vrot.slane %v1485, %v1491
        %v1493 = vcombine.low %v1467, %v1468
        %v1495 = vunpack.c.l.s4 1983009808
        %v1496 = vunpack.c.0.s8 %v1495
        %v1497 = vlaneseq
        %v1498 = vshrl.u32 %v1497, 7
        %v1499 = vsub.s32 %v1496, %v1498
        %v1500 = vrot.slane %v1493, %v1499
        %v1501 = vcombine.low %v1476, %v1484
        %v1502 = vcombine.high %v1476, %v1484
        %v1504 = vunpack.c.l.s4 1934713408
        %v1505 = vunpack.c.0.s8 %v1504
        %v1506 = vlaneseq
        %v1507 = vshrl.u32 %v1506, 7
        %v1508 = vsub.s32 %v1505, %v1507
        %v1509 = vrot.slane %v1501, %v1508
        %v1511 = vunpack.c.l.s4 1934713408
        %v1512 = vunpack.c.0.s8 %v1511
        %v1513 = vlaneseq
        %v1514 = vshrl.u32 %v1513, 7
        %v1515 = vsub.s32 %v1512, %v1514
        %v1516 = vrot.slane %v1502, %v1515
        %v1517 = vcombine.low %v1492, %v1500
        %v1518 = vcombine.high %v1492, %v1500
        %v1520 = vunpack.c.l.s4 1934713408
        %v1521 = vunpack.c.0.s8 %v1520
        %v1522 = vlaneseq
        %v1523 = vshrl.u32 %v1522, 7
        %v1524 = vsub.s32 %v1521, %v1523
        %v1525 = vrot.slane %v1517, %v1524
        %v1527 = vunpack.c.l.s4 1934713408
        %v1528 = vunpack.c.0.s8 %v1527
        %v1529 = vlaneseq
        %v1530 = vshrl.u32 %v1529, 7
        %v1531 = vsub.s32 %v1528, %v1530
        %v1532 = vrot.slane %v1518, %v1531
        %v1533 = vcombine.low %v1509, %v1525
        %v1534 = vcombine.high %v1509, %v1525
        %v1535 = vcombine.low %v1516, %v1532
        %v1536 = vcombine.high %v1516, %v1532
        %1538 = vrot.lane.b32.xlu0 %v1534, 8
        %v1539 = vpop.permute.xlu0 %1538
        %1542 = vrot.lane.b32.xlu0 %v1535, 16
        %v1543 = vpop.permute.xlu0 %1542
        %1546 = vrot.lane.b32.xlu0 %v1536, 24
        %v1547 = vpop.permute.xlu0 %1546
        %v1549 = vsel %vm983, %v1533, %v1539
        %vm1550 = vcmask 130048
        %v1551 = vsel %vm1550, %v1549, %v1543
        %vm1552 = vcmask 195584
        %v1553 = vsel %vm1552, %v1551, %v1547
        %v1554 = vpack.c.bf16 %v1553, %v1553
        %v1555 = vld [vmem:[%s3] sm:$0xf]
        %v1556 = vld [vmem:[%s3 + $0x4] sm:$0xf]
        %v1557 = vld [vmem:[%s3 + $0x8] sm:$0xf]
        %v1558 = vld [vmem:[%s3 + $0xc] sm:$0xf]
        %v1559 = vld [vmem:[%s4] sm:$0x1]
        %v1561 = vlaneseq
        %v1562 = vshrl.u32 %v1561, 7
        %v1563 = vsub.s32 0, %v1562
        %v1564 = vrot.slane %v1559, %v1563
        %v1570 = vunpack.c.l.b16 %v1555
        %v1571 = vunpack.c.l.b16 %v1556
        %v1572 = vunpack.c.l.b16 %v1557
        %v1573 = vunpack.c.l.b16 %v1558
        %v1574 = vpack.c.b16 %v1571, %v1570
        %v1575 = vpack.c.b16 %v1573, %v1572
        %v1579 = vsel %vm477, %v1554, 0
        %1581 = vmatprep.subr.bf16.mxu0 0
        %1582 = vmatpush1.bf16.msra.mxu0 %v1574
        %1583 = vmatprep.subr.bf16.mxu0 0
        %1584 = vmatpush1.bf16.msra.mxu0 %v1575
        %1585 = vmatprep.subr.bf16.mxu0 0
        %1586 = vmatpush1.bf16.msra.mxu0 0
        %1587 = vmatprep.subr.bf16.mxu0 0
        %1588 = vmatpush1.bf16.msra.mxu0 0
        %1589 = vmatprep.subr.bf16.mxu0 0
        %1590 = vmatpush1.bf16.msra.mxu0 0
        %1591 = vmatprep.subr.bf16.mxu0 0
        %1592 = vmatpush1.bf16.msra.mxu0 0
        %1593 = vmatprep.subr.bf16.mxu0 0
        %1594 = vmatpush1.bf16.msra.mxu0 0
        %1595 = vmatprep.subr.bf16.mxu0 0
        %1596 = vmatpush1.bf16.msra.mxu0 0
        %1597 = vmatprep.subr.bf16.mxu0 0
        %1598 = vmatpush1.bf16.msra.mxu0 0
        %1599 = vmatprep.subr.bf16.mxu0 0
        %1600 = vmatpush1.bf16.msra.mxu0 0
        %1601 = vmatprep.subr.bf16.mxu0 0
        %1602 = vmatpush1.bf16.msra.mxu0 0
        %1603 = vmatprep.subr.bf16.mxu0 0
        %1604 = vmatpush1.bf16.msra.mxu0 0
        %1605 = vmatprep.subr.bf16.mxu0 0
        %1606 = vmatpush1.bf16.msra.mxu0 0
        %1607 = vmatprep.subr.bf16.mxu0 0
        %1608 = vmatpush1.bf16.msra.mxu0 0
        %1609 = vmatprep.subr.bf16.mxu0 0
        %1610 = vmatpush1.bf16.msra.mxu0 0
        %1611 = vmatprep.subr.bf16.mxu0 0
        %1612 = vmatpush1.bf16.msra.mxu0 0
        %1613 = vmatprep.mubr.bf16.mxu0 0
        %1614 = vmatmul.mubr.bf16.gmra.mrb[0].mxu0 %v1579
        %v1615 = vpop.f32.mrb[0].mxu0
        %v1616 = vadd.f32 %v1564, %v1615
        %v1617 = vpop.f32.mrb[0].mxu0
        %v1618 = vpop.f32.mrb[0].mxu0
        %v1619 = vpop.f32.mrb[0].mxu0
        %1620 = vdwg.mxu0
        %v1621 = vadd.f32 %v452, %v1616
        %v1622 = vsel %vm477, %v1621, 0.0
        %1623 = vadd.xlane.f32.xlu0 %v1622
        %v1624 = vpop.xlane.xlu0 %1623
        %v1625 = vrcp.pop 32.0
        %v1626 = vmul.f32 %v1624, %v1625
        %v1627 = vsub.f32 %v1621, %v1626
        %v1628 = vmul.f32 %v1627, %v1627
        %v1629 = vsel %vm477, %v1628, 0.0
        %1630 = vadd.xlane.f32.xlu0 %v1629
        %v1631 = vpop.xlane.xlu0 %1630
        %v1632 = vmul.f32 %v1631, %v1625
        %v1633 = vadd.f32 %v1632, 1e-05
        %v1634 = vrsqrt.pop %v1633
        %v1635 = vmul.f32 %v1627, %v1634
        %v1636 = vld [vmem:[%s5] sm:$0x1]
        %v1638 = vlaneseq
        %v1639 = vshrl.u32 %v1638, 7
        %v1640 = vsub.s32 0, %v1639
        %v1641 = vrot.slane %v1636, %v1640
        %v1643 = vmul.f32 %v1635, %v1641
        %v1644 = vld [vmem:[%s6] sm:$0x1]
        %v1646 = vlaneseq
        %v1647 = vshrl.u32 %v1646, 7
        %v1648 = vsub.s32 0, %v1647
        %v1649 = vrot.slane %v1644, %v1648
        %v1651 = vadd.f32 %v1643, %v1649
        %v1652 = vpack.c.bf16 %v1651, %v1651
        %v1653 = vld [vmem:[#allocation2] sm:$0xf]
        %v1654 = vld [vmem:[#allocation2 + $0x4] sm:$0xf]
        %v1655 = vld [vmem:[#allocation2 + $0x8] sm:$0xf]
        %v1656 = vld [vmem:[#allocation2 + $0xc] sm:$0xf]
        %v1657 = vld [vmem:[%s8] sm:$0x1]
        %v1659 = vlaneseq
        %v1660 = vshrl.u32 %v1659, 7
        %v1661 = vsub.s32 0, %v1660
        %v1662 = vrot.slane %v1657, %v1661
        %v1668 = vunpack.c.l.b16 %v1653
        %v1669 = vunpack.c.l.b16 %v1654
        %v1670 = vunpack.c.l.b16 %v1655
        %v1671 = vunpack.c.l.b16 %v1656
        %v1672 = vpack.c.b16 %v1669, %v1668
        %v1673 = vpack.c.b16 %v1671, %v1670
        %v1677 = vsel %vm477, %v1652, 0
        %1679 = vmatprep.subr.bf16.mxu0 0
        %1680 = vmatpush1.bf16.msra.mxu0 %v1672
        %1681 = vmatprep.subr.bf16.mxu0 0
        %1682 = vmatpush1.bf16.msra.mxu0 %v1673
        %1683 = vmatprep.subr.bf16.mxu0 0
        %1684 = vmatpush1.bf16.msra.mxu0 0
        %1685 = vmatprep.subr.bf16.mxu0 0
        %1686 = vmatpush1.bf16.msra.mxu0 0
        %1687 = vmatprep.subr.bf16.mxu0 0
        %1688 = vmatpush1.bf16.msra.mxu0 0
        %1689 = vmatprep.subr.bf16.mxu0 0
        %1690 = vmatpush1.bf16.msra.mxu0 0
        %1691 = vmatprep.subr.bf16.mxu0 0
        %1692 = vmatpush1.bf16.msra.mxu0 0
        %1693 = vmatprep.subr.bf16.mxu0 0
        %1694 = vmatpush1.bf16.msra.mxu0 0
        %1695 = vmatprep.subr.bf16.mxu0 0
        %1696 = vmatpush1.bf16.msra.mxu0 0
        %1697 = vmatprep.subr.bf16.mxu0 0
        %1698 = vmatpush1.bf16.msra.mxu0 0
        %1699 = vmatprep.subr.bf16.mxu0 0
        %1700 = vmatpush1.bf16.msra.mxu0 0
        %1701 = vmatprep.subr.bf16.mxu0 0
        %1702 = vmatpush1.bf16.msra.mxu0 0
        %1703 = vmatprep.subr.bf16.mxu0 0
        %1704 = vmatpush1.bf16.msra.mxu0 0
        %1705 = vmatprep.subr.bf16.mxu0 0
        %1706 = vmatpush1.bf16.msra.mxu0 0
        %1707 = vmatprep.subr.bf16.mxu0 0
        %1708 = vmatpush1.bf16.msra.mxu0 0
        %1709 = vmatprep.subr.bf16.mxu0 0
        %1710 = vmatpush1.bf16.msra.mxu0 0
        %1711 = vmatprep.mubr.bf16.mxu0 0
        %1712 = vmatmul.mubr.bf16.gmra.mrb[0].mxu0 %v1677
        %v1713 = vpop.f32.mrb[0].mxu0
        %v1714 = vadd.f32 %v1662, %v1713
        %v1715 = vpop.f32.mrb[0].mxu0
        %v1716 = vpop.f32.mrb[0].mxu0
        %v1717 = vpop.f32.mrb[0].mxu0
        %1718 = vdwg.mxu0
        %v1719 = vmax.f32 %v1714, 0.0
        %v1720 = vpack.c.bf16 %v1719, %v1719
        %v1721 = vld [vmem:[%s9] sm:$0xf]
        %v1722 = vld [vmem:[%s9 + $0x4] sm:$0xf]
        %v1723 = vld [vmem:[%s9 + $0x8] sm:$0xf]
        %v1724 = vld [vmem:[%s9 + $0xc] sm:$0xf]
        %v1725 = vld [vmem:[%s9 + $0x10] sm:$0xf]
        %v1726 = vld [vmem:[%s9 + $0x14] sm:$0xf]
        %v1727 = vld [vmem:[%s9 + $0x18] sm:$0xf]
        %v1728 = vld [vmem:[%s9 + $0x1c] sm:$0xf]
        %v1729 = vld [vmem:[%s10] sm:$0x1]
        %v1731 = vlaneseq
        %v1732 = vshrl.u32 %v1731, 7
        %v1733 = vsub.s32 0, %v1732
        %v1734 = vrot.slane %v1729, %v1733
        %v1744 = vunpack.c.l.b16 %v1721
        %v1745 = vunpack.c.l.b16 %v1722
        %v1746 = vunpack.c.l.b16 %v1723
        %v1747 = vunpack.c.l.b16 %v1724
        %v1748 = vunpack.c.l.b16 %v1725
        %v1749 = vunpack.c.l.b16 %v1726
        %v1750 = vunpack.c.l.b16 %v1727
        %v1751 = vunpack.c.l.b16 %v1728
        %v1752 = vpack.c.b16 %v1745, %v1744
        %v1753 = vpack.c.b16 %v1747, %v1746
        %v1754 = vpack.c.b16 %v1749, %v1748
        %v1755 = vpack.c.b16 %v1751, %v1750
        %vm1760 = vcmask 523264
        %v1762 = vsel %vm1760, %v1720, 0
        %1764 = vmatprep.subr.bf16.mxu0 0
        %1765 = vmatpush1.bf16.msra.mxu0 %v1752
        %1766 = vmatprep.subr.bf16.mxu0 0
        %1767 = vmatpush1.bf16.msra.mxu0 %v1753
        %1768 = vmatprep.subr.bf16.mxu0 0
        %1769 = vmatpush1.bf16.msra.mxu0 %v1754
        %1770 = vmatprep.subr.bf16.mxu0 0
        %1771 = vmatpush1.bf16.msra.mxu0 %v1755
        %1772 = vmatprep.subr.bf16.mxu0 0
        %1773 = vmatpush1.bf16.msra.mxu0 0
        %1774 = vmatprep.subr.bf16.mxu0 0
        %1775 = vmatpush1.bf16.msra.mxu0 0
        %1776 = vmatprep.subr.bf16.mxu0 0
        %1777 = vmatpush1.bf16.msra.mxu0 0
        %1778 = vmatprep.subr.bf16.mxu0 0
        %1779 = vmatpush1.bf16.msra.mxu0 0
        %1780 = vmatprep.subr.bf16.mxu0 0
        %1781 = vmatpush1.bf16.msra.mxu0 0
        %1782 = vmatprep.subr.bf16.mxu0 0
        %1783 = vmatpush1.bf16.msra.mxu0 0
        %1784 = vmatprep.subr.bf16.mxu0 0
        %1785 = vmatpush1.bf16.msra.mxu0 0
        %1786 = vmatprep.subr.bf16.mxu0 0
        %1787 = vmatpush1.bf16.msra.mxu0 0
        %1788 = vmatprep.subr.bf16.mxu0 0
        %1789 = vmatpush1.bf16.msra.mxu0 0
        %1790 = vmatprep.subr.bf16.mxu0 0
        %1791 = vmatpush1.bf16.msra.mxu0 0
        %1792 = vmatprep.subr.bf16.mxu0 0
        %1793 = vmatpush1.bf16.msra.mxu0 0
        %1794 = vmatprep.subr.bf16.mxu0 0
        %1795 = vmatpush1.bf16.msra.mxu0 0
        %1796 = vmatprep.mubr.bf16.mxu0 0
        %1797 = vmatmul.mubr.bf16.gmra.mrb[0].mxu0 %v1762
        %v1798 = vpop.f32.mrb[0].mxu0
        %v1799 = vadd.f32 %v1734, %v1798
        %v1800 = vpop.f32.mrb[0].mxu0
        %v1801 = vpop.f32.mrb[0].mxu0
        %v1802 = vpop.f32.mrb[0].mxu0
        %1803 = vdwg.mxu0
        %v1804 = vadd.f32 %v1651, %v1799
        %v1805 = vsel %vm477, %v1804, 0.0
        %1806 = vadd.xlane.f32.xlu0 %v1805
        %v1807 = vpop.xlane.xlu0 %1806
        %v1808 = vmul.f32 %v1807, %v1625
        %v1809 = vsub.f32 %v1804, %v1808
        %v1810 = vmul.f32 %v1809, %v1809
        %v1811 = vsel %vm477, %v1810, 0.0
        %1812 = vadd.xlane.f32.xlu0 %v1811
        %v1813 = vpop.xlane.xlu0 %1812
        %v1814 = vmul.f32 %v1813, %v1625
        %v1815 = vadd.f32 %v1814, 1e-05
        %v1816 = vrsqrt.pop %v1815
        %v1817 = vmul.f32 %v1809, %v1816
        %v1818 = vld [vmem:[%s11] sm:$0x1]
        %v1820 = vlaneseq
        %v1821 = vshrl.u32 %v1820, 7
        %v1822 = vsub.s32 0, %v1821
        %v1823 = vrot.slane %v1818, %v1822
        %v1825 = vmul.f32 %v1817, %v1823
        %v1826 = vld [vmem:[%s12] sm:$0x1]
        %v1828 = vlaneseq
        %v1829 = vshrl.u32 %v1828, 7
        %v1830 = vsub.s32 0, %v1829
        %v1831 = vrot.slane %v1826, %v1830
        %v1833 = vadd.f32 %v1825, %v1831
        %1834 = vst.msk [vmem:[%s446] sm:$0xff] %vm477, %v1833
        %s1835 = sand.u32 %s314, 1
        %s1836 = scalar_lea.sflag [#allocation4], %s1835
        %s1837 = sand.u32 %s314, 1
        %s1838 = smul.addr %s1837, 8
        %s1839 = scalar_lea.vmem [#allocation5], %s1838
        // Predicated region
        $region77: #{tpu_custom_call.1} parent=71 // pred_check
          %p1840 = pneg %p324
        $region78: #{tpu_custom_call.1} parent=71 // pred_check_branch
          %1842 = sbr.rel (%p1840) target = $region80
        $region79: #{tpu_custom_call.1} parent=71 // pred_region
          %s1844 = ssub.s32 128, 128
          %1845 = vsyncadd %s1836, %s1844
          %s1846 = smul.addr %s28, 128
          %s1847 = scalar_lea.hbm %s13, %s1846
          %s1849 = sshll.u32 %s1839, 4
          %s1850 = int_to_ptr.vmem [resolvable:$true] %s1849
          %1852 = dma.vmem_to_hbm [thread:$0]  %s1850, 128, %s1847, %s1836
        $region80: #{tpu_custom_call.1} parent=71 // pred_fallthru
          _
      $region72: #{tpu_custom_call.1} parent=5 // pred_fallthru
        _
      %p1853 = scmp.le.s32.totalorder 2, %s23
      // Predicated region
      $region81: #{tpu_custom_call.1} parent=5 // pred_check
        %p1854 = pneg %p1853
      $region82: #{tpu_custom_call.1} parent=5 // pred_check_branch
        %1856 = sbr.rel (%p1854) target = $region84
      $region83: #{tpu_custom_call.1} parent=5 // pred_region
        %s1857 = ssub.s32 %s23, 2
        // Predicated region
        $region85: #{tpu_custom_call.1} parent=83 // pred_check
          %p1858 = pneg %p330
        $region86: #{tpu_custom_call.1} parent=83 // pred_check_branch
          %1860 = sbr.rel (%p1858) target = $region88
        $region87: #{tpu_custom_call.1} parent=83 // pred_region
          %s1861 = sand.u32 %s315, 1
          %s1862 = scalar_lea.sflag [#allocation4], %s1861
          %s1863 = sand.u32 %s315, 1
          %s1864 = smul.addr %s1863, 8
          %s1865 = scalar_lea.vmem [#allocation5], %s1864
          %1866 = dma.done %s1862, 128
        $region88: #{tpu_custom_call.1} parent=83 // pred_fallthru
          _
      $region84: #{tpu_custom_call.1} parent=5 // pred_fallthru
        _
    $region6: #{tpu_custom_call.1} parent=1 // loop_footer
      %s27 = sadd.s32 1, %s23
    $region7: #{tpu_custom_call.1} parent=1 // loop_footer_branch
      %22 = sbr.rel target = $region3
    $region8: #{tpu_custom_call.1} parent=1 // loop_exit
      _
    %1867 = vsyncpa [#allocation3], 1
    %s1868 = scalar_lea.sflag [#allocation3], 1
    %1869 = vsyncpa %s1868, 1
    %1870 = vsyncpa [#allocation4], 1
    %s1871 = scalar_lea.sflag [#allocation4], 1
    %1872 = vsyncpa %s1871, 1

</llo_original>
